<compile_context>
chip_gen: v7x
topology: tpu7x:2x2x1
jax: 0.10.0
libtpu: 0.0.40
codegen_flags: <defaults>
</compile_context>

<pallas_src>
import functools

import jax
import jax.numpy as jnp
from jax.experimental import pallas as pl
from jax.experimental.pallas import tpu as pltpu

EPS = 1e-5


@functools.lru_cache(maxsize=1)
def _vmem_limit_bytes():
    """Per-chip scoped-VMEM budget (review: don't cap v5e/v6e at a v7x number)."""
    try:
        cap = int(pltpu.get_tpu_info().vmem_capacity_bytes)
    except Exception:
        cap = 64 * 1024 * 1024
    return max(32 * 1024 * 1024, min(96 * 1024 * 1024, (cap * 3) // 4))


def _pick_batch_block(batch):
    """Images per stage-2 grid step: as large as 8, but keep >=2 grid steps when
    possible (v7x has 2 TensorCores), and always an exact divisor of batch."""
    cap = max(1, min(8, batch // 2))
    for d in range(cap, 0, -1):
        if batch % d == 0:
            return d
    return 1


# -----------------------------------------------------------------------------
# Kernel 1: conv1(7x7, s2, p3) + bn1 + relu.
#   Input `pw` is the width-direction im2col, phase-split along H:
#     pw[b*2 + pr, ih, jo, kw*C + c] = x_pad[b, 2*ih + pr, 2*jo + kw, c]
#   so height tap kh = 2*dh + pr is just the contiguous slice [dh : dh+Ho] of
#   phase plane pr -- 7 contiguous slices, 7 accumulated MXU matmuls, no
#   strided access and no full im2col in HBM.
# -----------------------------------------------------------------------------
def _conv1_kernel(pw_ref, w_ref, b_ref, o_ref, *, Ho, Wo, KW):
    acc = None
    for kh in range(7):
        pr, dh = kh & 1, kh >> 1
        a = pw_ref[pr, dh:dh + Ho, :, :]               # (Ho, Wo, KW) bf16
        a = a.reshape(Ho * Wo, KW)
        c = jnp.dot(a, w_ref[kh], preferred_element_type=jnp.float32)
        acc = c if acc is None else acc + c
    y = jnp.maximum(acc + b_ref[...], 0.0)             # f32 bias + ReLU
    o_ref[0] = y.astype(o_ref.dtype)                   # store bf16


def conv1_fused(pw, w1_bf, b1, *, batch, Ho, Wo):
    Hh = Ho + 3
    KW = pw.shape[-1]
    kernel = functools.partial(_conv1_kernel, Ho=Ho, Wo=Wo, KW=KW)
    return pl.pallas_call(
        kernel,
        out_shape=jax.ShapeDtypeStruct((batch, Ho * Wo, 64), jnp.bfloat16),
        grid=(batch,),
        in_specs=[
            pl.BlockSpec((2, Hh, Wo, KW), lambda b: (b, 0, 0, 0)),
            pl.BlockSpec((7, KW, 64), lambda b: (0, 0, 0)),
            pl.BlockSpec((1, 64), lambda b: (0, 0)),
        ],
        out_specs=pl.BlockSpec((1, Ho * Wo, 64), lambda b: (b, 0, 0)),
        compiler_params=pltpu.CompilerParams(
            dimension_semantics=("parallel",),
            vmem_limit_bytes=_vmem_limit_bytes(),
        ),
    )(pw, w1_bf, b1)


# -----------------------------------------------------------------------------
# Kernel 2: maxpool + ResBlock + adaptive avg-pool + 3 packed heads,
#           a block of `bb` images per grid step.
# -----------------------------------------------------------------------------
def _stage2_kernel(y_ref, avg_ref, wcat_ref, bcat_ref, wc2_ref, bc2_ref,
                   w1h_ref, b1h_ref, w2h_ref, b2h_ref, o_ref, *, Hp, Wp, bb):
    n_ext = (Hp + 1) * (Wp + 1)

    # --- MaxPool2d(3, stride=2, padding=1): elementwise max over 9 shifted
    #     contiguous row-slices of the parity-phase-flattened activations
    #     (bf16 values; max is exact, zero padding is safe post-ReLU).
    xp = None
    for s, da in ((0, 0), (1, 0), (0, 1)):        # padded rows 2a, 2a+1, 2a+2
        for t, db in ((0, 0), (1, 0), (0, 1)):    # padded cols 2c, 2c+1, 2c+2
            off = da * (Wp + 1) + db
            v = y_ref[:, 2 * s + t, off:off + n_ext, :]     # (bb, n_ext, 64)
            xp = v if xp is None else jnp.maximum(xp, v)
    xp2 = xp.reshape(bb * n_ext, 64)              # all images share the matmuls

    # --- ResBlock (1x1 convs == channel matmuls; BN folded into weights).
    #     wcat = [downsample 64->256 | conv1 64->64] so xp hits the MXU once.
    z = jnp.dot(xp2, wcat_ref[...], preferred_element_type=jnp.float32) + bcat_ref[...]
    ident = z[:, :256]                            # downsample conv + bn
    h = jnp.maximum(z[:, 256:], 0.0)              # conv1 + bn1 + relu
    h2 = jnp.dot(h.astype(jnp.bfloat16), wc2_ref[...],
                 preferred_element_type=jnp.float32) + bc2_ref[...]
    feat = jnp.maximum(h2 + ident, 0.0)           # (bb*n_ext, 256) f32

    # --- AdaptiveAvgPool2d((1,1)): masked in-kernel reduction per image.
    #     avg_ref holds 1/(Hp*Wp) on valid rows and 0 on padding rows.
    feat3 = feat.reshape(bb, n_ext, 256)
    pooled = jnp.sum(feat3 * avg_ref[...], axis=1)          # (bb, 256)

    # --- Three (Linear, ReLU, Linear) heads packed into two matmuls; second
    #     weight is block-diagonal and lane-padded to 128 output columns.
    h1 = jnp.maximum(
        jnp.dot(pooled, w1h_ref[...], preferred_element_type=jnp.float32)
        + b1h_ref[...], 0.0)                      # (bb, 96)
    out = jnp.dot(h1, w2h_ref[...], preferred_element_type=jnp.float32) + b2h_ref[...]
    o_ref[...] = out.reshape(bb, 1, 128)          # lane-dense output tile


def _full_block(a):
    zeros = (0,) * a.ndim
    return pl.BlockSpec(a.shape, lambda b: zeros)


def fused_stage2(yph, avg_w, wcat, bcat, wc2, bc2, w1h, b1h, w2h, b2h, *, Hp, Wp):
    batch, _, nr, c = yph.shape
    bb = _pick_batch_block(batch)
    kernel = functools.partial(_stage2_kernel, Hp=Hp, Wp=Wp, bb=bb)
    return pl.pallas_call(
        kernel,
        out_shape=jax.ShapeDtypeStruct((batch, 1, 128), jnp.float32),
        grid=(batch // bb,),
        in_specs=[
            pl.BlockSpec((bb, 4, nr, c), lambda i: (i, 0, 0, 0)),
            _full_block(avg_w), _full_block(wcat), _full_block(bcat),
            _full_block(wc2), _full_block(bc2),
            _full_block(w1h), _full_block(b1h),
            _full_block(w2h), _full_block(b2h),
        ],
        out_specs=pl.BlockSpec((bb, 1, 128), lambda i: (i, 0, 0)),
        compiler_params=pltpu.CompilerParams(
            dimension_semantics=("parallel",),
            vmem_limit_bytes=_vmem_limit_bytes(),
        ),
    )(yph, avg_w, wcat, bcat, wc2, bc2, w1h, b1h, w2h, b2h)


# -----------------------------------------------------------------------------
# Glue: partial (width-only) im2col, maxpool phase-flattening, BN folding,
#       weight packing (plain JAX on tiny tensors).
# -----------------------------------------------------------------------------
def build_w_im2col(x_nhwc, Ho, Wo):
    """Width-direction (stride-2) im2col of the zero-padded input, phase-split
    along H by 2.  Output: (B*2, Ho+3, Wo, 7*C) with
       out[b*2+pr, ih, jo, kw*C+c] = x_pad[b, 2*ih+pr, 2*jo+kw, c].
    This is ~3.5x the raw (tiny) input in bf16, vs ~12x f32 for a full im2col."""
    B, H, W, C = x_nhwc.shape
    Hh = Ho + 3
    pad_h_after = 2 * Hh - H - 3                    # >= 3, all zeros, never used
    xp = jnp.pad(x_nhwc, ((0, 0), (3, pad_h_after), (3, 3), (0, 0)))
    Hp2 = 2 * Hh
    cols = []
    for kw in range(7):
        v = jax.lax.slice(xp, (0, 0, kw, 0),
                          (B, Hp2, kw + 2 * (Wo - 1) + 1, C),
                          (1, 1, 2, 1))             # (B, 2*Hh, Wo, C)
        cols.append(v)
    pw = jnp.stack(cols, axis=3).reshape(B, Hp2, Wo, 7 * C)
    pw = pw.reshape(B, Hh, 2, Wo, 7 * C).transpose(0, 2, 1, 3, 4)
    return pw.reshape(B * 2, Hh, Wo, 7 * C).astype(jnp.bfloat16)


def phase_flatten_for_maxpool(y1):
    """Parity-phase-flattened, zero-padded view of y1 (bf16) so the 3x3/s2/p1
    maxpool becomes 9 contiguous row-slices inside the kernel.
    Output: (B, 4, (Hp+1)*(Wp+1) + Wp + 2, C) with phase p = 2*(row%2)+(col%2)
    of the 1-padded conv output."""
    B, H, W, C = y1.shape
    Hp = (H - 1) // 2 + 1
    Wp = (W - 1) // 2 + 1
    ypad = jnp.pad(y1, ((0, 0),
                        (1, 2 * (Hp + 1) - H - 1),
                        (1, 2 * (Wp + 1) - W - 1),
                        (0, 0)))                    # (B, 2(Hp+1), 2(Wp+1), C)
    ph = ypad.reshape(B, Hp + 1, 2, Wp + 1, 2, C).transpose(0, 2, 4, 1, 3, 5)
    ph = ph.reshape(B, 4, (Hp + 1) * (Wp + 1), C)
    ph = jnp.pad(ph, ((0, 0), (0, 0), (0, Wp + 2), (0, 0)))  # room for shifts
    return ph, Hp, Wp


def make_avg_weights(Hp, Wp):
    """Per-row averaging weights: 1/(Hp*Wp) on valid pool-output rows, else 0."""
    w = jnp.zeros((Hp + 1, Wp + 1), jnp.float32)
    w = w.at[:Hp, :Wp].set(1.0 / (Hp * Wp))
    return w.reshape(1, (Hp + 1) * (Wp + 1), 1)


def _bn_fold(w_kc, b_c):
    """Fold eval-mode BatchNorm (init stats: mean=0, var=1, gamma=1, beta=0)
    into a (K, C) weight matrix and (1, C) bias, in f32."""
    c = w_kc.shape[-1]
    scale = 1.0 / jnp.sqrt(jnp.ones((c,), jnp.float32) + EPS)
    return w_kc * scale[None, :], (b_c * scale)[None, :]


def prepare_operands(p, cin):
    ops = {}
    # conv1 (7x7) + bn1: weight per height tap, (kw, cin) feature order.
    w1 = jnp.transpose(p["conv1_w"], (2, 3, 1, 0)).reshape(49 * cin, 64)
    w1, b1 = _bn_fold(w1, p["conv1_b"])
    ops["w1_f32"], ops["b1"] = w1, b1
    ops["w1_bf"] = w1.reshape(7, 7 * cin, 64).astype(jnp.bfloat16)   # no K padding

    # ResBlock 1x1 convs + BN, packed: [downsample(64->256) | conv1(64->64)]
    wc1, bc1 = _bn_fold(p["rb_c1_w"].reshape(64, 64).T, p["rb_c1_b"])
    wc2, bc2 = _bn_fold(p["rb_c2_w"].reshape(256, 64).T, p["rb_c2_b"])
    wds, bds = _bn_fold(p["ds_w"].reshape(256, 64).T, p["ds_b"])
    ops["wcat_bf"] = jnp.concatenate([wds, wc1], axis=1).astype(jnp.bfloat16)  # (64, 320)
    ops["bcat"] = jnp.concatenate([bds, bc1], axis=1)                          # (1, 320)
    ops["wc2_bf"] = wc2.astype(jnp.bfloat16)                                   # (64, 256)
    ops["bc2"] = bc2                                                           # (1, 256)

    # Heads: layer-1 packed to (256, 96); layer-2 block-diagonal, lane-padded.
    w1h = jnp.concatenate([p["cube_w1"].T, p["cyl_w1"].T, p["sph_w1"].T], axis=1)
    b1h = jnp.concatenate([p["cube_b1"], p["cyl_b1"], p["sph_b1"]])[None, :]
    w2h = jnp.zeros((96, 128), jnp.float32)
    b2h = jnp.zeros((1, 128), jnp.float32)
    for i, name in enumerate(("cube", "cyl", "sph")):
        w2h = w2h.at[32 * i:32 * (i + 1), 11 * i:11 * (i + 1)].set(p[f"{name}_w2"].T)
        b2h = b2h.at[0, 11 * i:11 * (i + 1)].set(p[f"{name}_b2"])
    ops["w1h"], ops["b1h"], ops["w2h"], ops["b2h"] = w1h, b1h, w2h, b2h
    return ops


def make_params(key, cin):
    ks = iter(jax.random.split(key, 32))

    def nrm(shape, scale=0.1):
        return scale * jax.random.normal(next(ks), shape, dtype=jnp.float32)

    p = {}
    p["conv1_w"] = nrm((64, cin, 7, 7))
    p["conv1_b"] = nrm((64,), 0.05)
    p["rb_c1_w"] = nrm((64, 64, 1, 1))
    p["rb_c1_b"] = nrm((64,), 0.05)
    p["rb_c2_w"] = nrm((256, 64, 1, 1))
    p["rb_c2_b"] = nrm((256,), 0.05)
    p["ds_w"] = nrm((256, 64, 1, 1))
    p["ds_b"] = nrm((256,), 0.05)
    for name in ("cube", "cyl", "sph"):
        p[f"{name}_w1"] = nrm((32, 256))
        p[f"{name}_b1"] = nrm((32,), 0.05)
        p[f"{name}_w2"] = nrm((11, 32))
        p[f"{name}_b2"] = nrm((11,), 0.05)
    return p


# -----------------------------------------------------------------------------
# Forward pass
# -----------------------------------------------------------------------------
@jax.jit
def wangnet_forward(x_nchw, p):
    x = jnp.transpose(x_nchw, (0, 2, 3, 1)).astype(jnp.float32)     # NCHW -> NHWC
    B, H, W, cin = x.shape
    ops = prepare_operands(p, cin)

    # ---- stage 1: conv1 + bn1 + relu, in-kernel height im2col, bf16 output ----
    Ho = (H - 1) // 2 + 1
    Wo = (W - 1) // 2 + 1
    pw = build_w_im2col(x, Ho, Wo)                      # (B*2, Ho+3, Wo, 7*cin) bf16
    y1 = conv1_fused(pw, ops["w1_bf"], ops["b1"], batch=B, Ho=Ho, Wo=Wo)
    y1 = y1.reshape(B, Ho, Wo, 64)                      # bf16, layout-free reshape

    # ---- stage 2: maxpool + ResBlock + avgpool + heads, block of images/step ----
    yph, Hp, Wp = phase_flatten_for_maxpool(y1)         # bf16
    avg_w = make_avg_weights(Hp, Wp)
    out = fused_stage2(yph, avg_w, ops["wcat_bf"], ops["bcat"], ops["wc2_bf"],
                       ops["bc2"], ops["w1h"], ops["b1h"], ops["w2h"], ops["b2h"],
                       Hp=Hp, Wp=Wp)
    out = out.reshape(B, 128)
    return out[:, 0:11], out[:, 11:22], out[:, 22:33]


def reference_forward(x_nchw, p):
    """Pure-JAX reference of the same BN-folded computation, mirroring the
    kernels' bf16 operands / bf16 y1 storage / f32 accumulation so the check
    can be tight."""
    x = jnp.transpose(x_nchw, (0, 2, 3, 1)).astype(jnp.float32)
    B, _, _, cin = x.shape
    ops = prepare_operands(p, cin)

    # conv1 + bn1 + relu (bf16 products, f32 accumulation, bf16 storage)
    w_hwio = ops["w1_f32"].reshape(7, 7, cin, 64).astype(jnp.bfloat16)
    y1 = jax.lax.conv_general_dilated(
        x.astype(jnp.bfloat16), w_hwio, window_strides=(2, 2),
        padding=((3, 3), (3, 3)), dimension_numbers=("NHWC", "HWIO", "NHWC"),
        preferred_element_type=jnp.float32)
    y1 = jnp.maximum(y1 + ops["b1"], 0.0).astype(jnp.bfloat16).astype(jnp.float32)

    # maxpool 3x3, stride 2, pad 1
    xp = jax.lax.reduce_window(y1, -jnp.inf, jax.lax.max,
                               (1, 3, 3, 1), (1, 2, 2, 1),
                               ((0, 0), (1, 1), (1, 1), (0, 0)))
    _, Hp, Wp, _ = xp.shape
    xpf = xp.reshape(B * Hp * Wp, 64)

    # ResBlock
    z = jnp.dot(xpf.astype(jnp.bfloat16), ops["wcat_bf"],
                preferred_element_type=jnp.float32) + ops["bcat"]
    ident = z[:, :256]
    h = jnp.maximum(z[:, 256:], 0.0)
    h2 = jnp.dot(h.astype(jnp.bfloat16), ops["wc2_bf"],
                 preferred_element_type=jnp.float32) + ops["bc2"]
    feat = jnp.maximum(h2 + ident, 0.0)

    # adaptive avg pool + heads
    pooled = jnp.sum(feat.reshape(B, Hp * Wp, 256), axis=1) * (1.0 / (Hp * Wp))
    h1 = jnp.maximum(pooled @ ops["w1h"] + ops["b1h"], 0.0)
    out = h1 @ ops["w2h"] + ops["b2h"]
    return out[:, 0:11], out[:, 11:22], out[:, 22:33]


if __name__ == "__main__":
    key = jax.random.PRNGKey(0)
    kx, kp = jax.random.split(key)
    x = jax.random.normal(kx, (2, 4, 16, 16), dtype=jnp.float32)    # NCHW like PyTorch
    params = make_params(kp, 4)

    outs = jax.block_until_ready(wangnet_forward(x, params))
    refs = reference_forward(x, params)

    assert len(outs) == 3
    for o, r in zip(outs, refs):
        assert o.shape == (2, 11), o.shape
        assert bool(jnp.all(jnp.isfinite(o)))
        err = float(jnp.max(jnp.abs(o - r)))
        assert bool(jnp.allclose(o, r, rtol=1e-3, atol=1e-3)), err
    print("KERNEL_OK")
</pallas_src>

<mosaic_0001>
module attributes {stable_mosaic.version = 11 : i64} {
  func.func @_conv1_kernel(%arg0: i32, %arg1: memref<2x11x8x28xbf16, #tpu.memory_space<vmem>>, %arg2: memref<7x28x64xbf16, #tpu.memory_space<vmem>>, %arg3: memref<1x64xf32, #tpu.memory_space<vmem>>, %arg4: memref<1x64x64xbf16, #tpu.memory_space<vmem>>) attributes {dimension_semantics = [#tpu.dimension_semantics<parallel>], iteration_bounds = array<i64: 2>, scalar_prefetch = 0 : i64, scratch_operands = 0 : i64, tpu.core_type = #tpu.core_type<tc>, window_params = [{transform_indices = @transform_0, window_bounds = array<i64: 2, 11, 8, 28>}, {pipeline_mode = #tpu.pipeline_mode<synchronous>, transform_indices = @transform_1, window_bounds = array<i64: 7, 28, 64>}, {pipeline_mode = #tpu.pipeline_mode<synchronous>, transform_indices = @transform_2, window_bounds = array<i64: 1, 64>}, {transform_indices = @transform_3, window_bounds = array<i64: 1, 64, 64>}]} {
    %c0 = arith.constant 0 : index
    %c0_0 = arith.constant 0 : index
    %c0_1 = arith.constant 0 : index
    %c0_2 = arith.constant 0 : index
    %0 = vector.load %arg1[%c0, %c0_0, %c0_1, %c0_2] : memref<2x11x8x28xbf16, #tpu.memory_space<vmem>>, vector<1x8x8x28xbf16>
    %1 = vector.shape_cast %0 : vector<1x8x8x28xbf16> to vector<8x8x28xbf16>
    %2 = vector.shape_cast %1 : vector<8x8x28xbf16> to vector<64x28xbf16>
    %c0_3 = arith.constant 0 : index
    %c0_4 = arith.constant 0 : index
    %c0_5 = arith.constant 0 : index
    %3 = vector.load %arg2[%c0_3, %c0_4, %c0_5] : memref<7x28x64xbf16, #tpu.memory_space<vmem>>, vector<1x28x64xbf16>
    %4 = vector.shape_cast %3 : vector<1x28x64xbf16> to vector<28x64xbf16>
    %cst = arith.constant dense<0.000000e+00> : vector<64x64xf32>
    %5 = tpu.matmul %2, %4, %cst {dimension_numbers = #tpu.dot_dimension_numbers<[1], [0], [0], [1], [0, 0, 1, 1], [], []>} : vector<64x28xbf16>, vector<28x64xbf16>, vector<64x64xf32> -> vector<64x64xf32>
    %c1 = arith.constant 1 : index
    %c0_6 = arith.constant 0 : index
    %c0_7 = arith.constant 0 : index
    %c0_8 = arith.constant 0 : index
    %6 = vector.load %arg1[%c1, %c0_6, %c0_7, %c0_8] : memref<2x11x8x28xbf16, #tpu.memory_space<vmem>>, vector<1x8x8x28xbf16>
    %7 = vector.shape_cast %6 : vector<1x8x8x28xbf16> to vector<8x8x28xbf16>
    %8 = vector.shape_cast %7 : vector<8x8x28xbf16> to vector<64x28xbf16>
    %c1_9 = arith.constant 1 : index
    %c0_10 = arith.constant 0 : index
    %c0_11 = arith.constant 0 : index
    %9 = vector.load %arg2[%c1_9, %c0_10, %c0_11] : memref<7x28x64xbf16, #tpu.memory_space<vmem>>, vector<1x28x64xbf16>
    %10 = vector.shape_cast %9 : vector<1x28x64xbf16> to vector<28x64xbf16>
    %cst_12 = arith.constant dense<0.000000e+00> : vector<64x64xf32>
    %11 = tpu.matmul %8, %10, %cst_12 {dimension_numbers = #tpu.dot_dimension_numbers<[1], [0], [0], [1], [0, 0, 1, 1], [], []>} : vector<64x28xbf16>, vector<28x64xbf16>, vector<64x64xf32> -> vector<64x64xf32>
    %12 = arith.addf %5, %11 : vector<64x64xf32>
    %c0_13 = arith.constant 0 : index
    %c1_14 = arith.constant 1 : index
    %c0_15 = arith.constant 0 : index
    %c0_16 = arith.constant 0 : index
    %13 = vector.load %arg1[%c0_13, %c1_14, %c0_15, %c0_16] : memref<2x11x8x28xbf16, #tpu.memory_space<vmem>>, vector<1x8x8x28xbf16>
    %14 = vector.shape_cast %13 : vector<1x8x8x28xbf16> to vector<8x8x28xbf16>
    %15 = vector.shape_cast %14 : vector<8x8x28xbf16> to vector<64x28xbf16>
    %c2 = arith.constant 2 : index
    %c0_17 = arith.constant 0 : index
    %c0_18 = arith.constant 0 : index
    %16 = vector.load %arg2[%c2, %c0_17, %c0_18] : memref<7x28x64xbf16, #tpu.memory_space<vmem>>, vector<1x28x64xbf16>
    %17 = vector.shape_cast %16 : vector<1x28x64xbf16> to vector<28x64xbf16>
    %cst_19 = arith.constant dense<0.000000e+00> : vector<64x64xf32>
    %18 = tpu.matmul %15, %17, %cst_19 {dimension_numbers = #tpu.dot_dimension_numbers<[1], [0], [0], [1], [0, 0, 1, 1], [], []>} : vector<64x28xbf16>, vector<28x64xbf16>, vector<64x64xf32> -> vector<64x64xf32>
    %19 = arith.addf %12, %18 : vector<64x64xf32>
    %c1_20 = arith.constant 1 : index
    %c1_21 = arith.constant 1 : index
    %c0_22 = arith.constant 0 : index
    %c0_23 = arith.constant 0 : index
    %20 = vector.load %arg1[%c1_20, %c1_21, %c0_22, %c0_23] : memref<2x11x8x28xbf16, #tpu.memory_space<vmem>>, vector<1x8x8x28xbf16>
    %21 = vector.shape_cast %20 : vector<1x8x8x28xbf16> to vector<8x8x28xbf16>
    %22 = vector.shape_cast %21 : vector<8x8x28xbf16> to vector<64x28xbf16>
    %c3 = arith.constant 3 : index
    %c0_24 = arith.constant 0 : index
    %c0_25 = arith.constant 0 : index
    %23 = vector.load %arg2[%c3, %c0_24, %c0_25] : memref<7x28x64xbf16, #tpu.memory_space<vmem>>, vector<1x28x64xbf16>
    %24 = vector.shape_cast %23 : vector<1x28x64xbf16> to vector<28x64xbf16>
    %cst_26 = arith.constant dense<0.000000e+00> : vector<64x64xf32>
    %25 = tpu.matmul %22, %24, %cst_26 {dimension_numbers = #tpu.dot_dimension_numbers<[1], [0], [0], [1], [0, 0, 1, 1], [], []>} : vector<64x28xbf16>, vector<28x64xbf16>, vector<64x64xf32> -> vector<64x64xf32>
    %26 = arith.addf %19, %25 : vector<64x64xf32>
    %c0_27 = arith.constant 0 : index
    %c2_28 = arith.constant 2 : index
    %c0_29 = arith.constant 0 : index
    %c0_30 = arith.constant 0 : index
    %27 = vector.load %arg1[%c0_27, %c2_28, %c0_29, %c0_30] : memref<2x11x8x28xbf16, #tpu.memory_space<vmem>>, vector<1x8x8x28xbf16>
    %28 = vector.shape_cast %27 : vector<1x8x8x28xbf16> to vector<8x8x28xbf16>
    %29 = vector.shape_cast %28 : vector<8x8x28xbf16> to vector<64x28xbf16>
    %c4 = arith.constant 4 : index
    %c0_31 = arith.constant 0 : index
    %c0_32 = arith.constant 0 : index
    %30 = vector.load %arg2[%c4, %c0_31, %c0_32] : memref<7x28x64xbf16, #tpu.memory_space<vmem>>, vector<1x28x64xbf16>
    %31 = vector.shape_cast %30 : vector<1x28x64xbf16> to vector<28x64xbf16>
    %cst_33 = arith.constant dense<0.000000e+00> : vector<64x64xf32>
    %32 = tpu.matmul %29, %31, %cst_33 {dimension_numbers = #tpu.dot_dimension_numbers<[1], [0], [0], [1], [0, 0, 1, 1], [], []>} : vector<64x28xbf16>, vector<28x64xbf16>, vector<64x64xf32> -> vector<64x64xf32>
    %33 = arith.addf %26, %32 : vector<64x64xf32>
    %c1_34 = arith.constant 1 : index
    %c2_35 = arith.constant 2 : index
    %c0_36 = arith.constant 0 : index
    %c0_37 = arith.constant 0 : index
    %34 = vector.load %arg1[%c1_34, %c2_35, %c0_36, %c0_37] : memref<2x11x8x28xbf16, #tpu.memory_space<vmem>>, vector<1x8x8x28xbf16>
    %35 = vector.shape_cast %34 : vector<1x8x8x28xbf16> to vector<8x8x28xbf16>
    %36 = vector.shape_cast %35 : vector<8x8x28xbf16> to vector<64x28xbf16>
    %c5 = arith.constant 5 : index
    %c0_38 = arith.constant 0 : index
    %c0_39 = arith.constant 0 : index
    %37 = vector.load %arg2[%c5, %c0_38, %c0_39] : memref<7x28x64xbf16, #tpu.memory_space<vmem>>, vector<1x28x64xbf16>
    %38 = vector.shape_cast %37 : vector<1x28x64xbf16> to vector<28x64xbf16>
    %cst_40 = arith.constant dense<0.000000e+00> : vector<64x64xf32>
    %39 = tpu.matmul %36, %38, %cst_40 {dimension_numbers = #tpu.dot_dimension_numbers<[1], [0], [0], [1], [0, 0, 1, 1], [], []>} : vector<64x28xbf16>, vector<28x64xbf16>, vector<64x64xf32> -> vector<64x64xf32>
    %40 = arith.addf %33, %39 : vector<64x64xf32>
    %c0_41 = arith.constant 0 : index
    %c3_42 = arith.constant 3 : index
    %c0_43 = arith.constant 0 : index
    %c0_44 = arith.constant 0 : index
    %41 = vector.load %arg1[%c0_41, %c3_42, %c0_43, %c0_44] : memref<2x11x8x28xbf16, #tpu.memory_space<vmem>>, vector<1x8x8x28xbf16>
    %42 = vector.shape_cast %41 : vector<1x8x8x28xbf16> to vector<8x8x28xbf16>
    %43 = vector.shape_cast %42 : vector<8x8x28xbf16> to vector<64x28xbf16>
    %c6 = arith.constant 6 : index
    %c0_45 = arith.constant 0 : index
    %c0_46 = arith.constant 0 : index
    %44 = vector.load %arg2[%c6, %c0_45, %c0_46] : memref<7x28x64xbf16, #tpu.memory_space<vmem>>, vector<1x28x64xbf16>
    %45 = vector.shape_cast %44 : vector<1x28x64xbf16> to vector<28x64xbf16>
    %cst_47 = arith.constant dense<0.000000e+00> : vector<64x64xf32>
    %46 = tpu.matmul %43, %45, %cst_47 {dimension_numbers = #tpu.dot_dimension_numbers<[1], [0], [0], [1], [0, 0, 1, 1], [], []>} : vector<64x28xbf16>, vector<28x64xbf16>, vector<64x64xf32> -> vector<64x64xf32>
    %47 = arith.addf %40, %46 : vector<64x64xf32>
    %c0_48 = arith.constant 0 : index
    %c0_49 = arith.constant 0 : index
    %48 = vector.load %arg3[%c0_48, %c0_49] : memref<1x64xf32, #tpu.memory_space<vmem>>, vector<1x64xf32>
    %49 = vector.broadcast %48 : vector<1x64xf32> to vector<64x64xf32>
    %50 = arith.addf %47, %49 : vector<64x64xf32>
    %cst_50 = arith.constant 0.000000e+00 : f32
    %51 = vector.broadcast %cst_50 : f32 to vector<64x64xf32>
    %52 = arith.maximumf %50, %51 : vector<64x64xf32>
    %53 = arith.truncf %52 : vector<64x64xf32> to vector<64x64xbf16>
    %c0_51 = arith.constant 0 : index
    %c0_52 = arith.constant 0 : index
    %c0_53 = arith.constant 0 : index
    %54 = vector.load %arg4[%c0_51, %c0_52, %c0_53] : memref<1x64x64xbf16, #tpu.memory_space<vmem>>, vector<1x64x64xbf16>
    %55 = vector.shape_cast %54 : vector<1x64x64xbf16> to vector<64x64xbf16>
    %56 = vector.shape_cast %53 : vector<64x64xbf16> to vector<1x64x64xbf16>
    tpu.vector_store %arg4[%c0_51, %c0_52, %c0_53], %56 {strides = array<i32>} : memref<1x64x64xbf16, #tpu.memory_space<vmem>>, vector<1x64x64xbf16>,
    return
  }
  func.func @transform_0(%arg0: i32) -> (i32, i32, i32, i32) {
    %c0_i32 = arith.constant 0 : i32
    %c0_i32_0 = arith.constant 0 : i32
    %c0_i32_1 = arith.constant 0 : i32
    %c0_i32_2 = arith.constant 0 : i32
    return %arg0, %c0_i32, %c0_i32_0, %c0_i32_1 : i32, i32, i32, i32
  }
  func.func @transform_1(%arg0: i32) -> (i32, i32, i32) {
    %c0_i32 = arith.constant 0 : i32
    %c0_i32_0 = arith.constant 0 : i32
    %c0_i32_1 = arith.constant 0 : i32
    %c0_i32_2 = arith.constant 0 : i32
    return %c0_i32, %c0_i32_0, %c0_i32_1 : i32, i32, i32
  }
  func.func @transform_2(%arg0: i32) -> (i32, i32) {
    %c0_i32 = arith.constant 0 : i32
    %c0_i32_0 = arith.constant 0 : i32
    %c0_i32_1 = arith.constant 0 : i32
    return %c0_i32, %c0_i32_0 : i32, i32
  }
  func.func @transform_3(%arg0: i32) -> (i32, i32, i32) {
    %c0_i32 = arith.constant 0 : i32
    %c0_i32_0 = arith.constant 0 : i32
    %c0_i32_1 = arith.constant 0 : i32
    return %arg0, %c0_i32, %c0_i32_0 : i32, i32, i32
  }
}

module attributes {stable_mosaic.version = 11 : i64} {
  func.func @_stage2_kernel(%arg0: i32, %arg1: memref<1x4x31x64xbf16, #tpu.memory_space<vmem>>, %arg2: memref<1x25x1xf32, #tpu.memory_space<vmem>>, %arg3: memref<64x320xbf16, #tpu.memory_space<vmem>>, %arg4: memref<1x320xf32, #tpu.memory_space<vmem>>, %arg5: memref<64x256xbf16, #tpu.memory_space<vmem>>, %arg6: memref<1x256xf32, #tpu.memory_space<vmem>>, %arg7: memref<256x96xf32, #tpu.memory_space<vmem>>, %arg8: memref<1x96xf32, #tpu.memory_space<vmem>>, %arg9: memref<96x128xf32, #tpu.memory_space<vmem>>, %arg10: memref<1x128xf32, #tpu.memory_space<vmem>>, %arg11: memref<1x1x128xf32, #tpu.memory_space<vmem>>) attributes {dimension_semantics = [#tpu.dimension_semantics<parallel>], iteration_bounds = array<i64: 2>, scalar_prefetch = 0 : i64, scratch_operands = 0 : i64, tpu.core_type = #tpu.core_type<tc>, window_params = [{transform_indices = @transform_0, window_bounds = array<i64: 1, 4, 31, 64>}, {pipeline_mode = #tpu.pipeline_mode<synchronous>, transform_indices = @transform_1, window_bounds = array<i64: 1, 25, 1>}, {pipeline_mode = #tpu.pipeline_mode<synchronous>, transform_indices = @transform_2, window_bounds = array<i64: 64, 320>}, {pipeline_mode = #tpu.pipeline_mode<synchronous>, transform_indices = @transform_3, window_bounds = array<i64: 1, 320>}, {pipeline_mode = #tpu.pipeline_mode<synchronous>, transform_indices = @transform_4, window_bounds = array<i64: 64, 256>}, {pipeline_mode = #tpu.pipeline_mode<synchronous>, transform_indices = @transform_5, window_bounds = array<i64: 1, 256>}, {pipeline_mode = #tpu.pipeline_mode<synchronous>, transform_indices = @transform_6, window_bounds = array<i64: 256, 96>}, {pipeline_mode = #tpu.pipeline_mode<synchronous>, transform_indices = @transform_7, window_bounds = array<i64: 1, 96>}, {pipeline_mode = #tpu.pipeline_mode<synchronous>, transform_indices = @transform_8, window_bounds = array<i64: 96, 128>}, {pipeline_mode = #tpu.pipeline_mode<synchronous>, transform_indices = @transform_9, window_bounds = array<i64: 1, 128>}, {transform_indices = @transform_10, window_bounds = array<i64: 1, 1, 128>}]} {
    %c0 = arith.constant 0 : index
    %c0_0 = arith.constant 0 : index
    %c0_1 = arith.constant 0 : index
    %c0_2 = arith.constant 0 : index
    %0 = vector.load %arg1[%c0, %c0_0, %c0_1, %c0_2] : memref<1x4x31x64xbf16, #tpu.memory_space<vmem>>, vector<1x1x25x64xbf16>
    %1 = vector.shape_cast %0 : vector<1x1x25x64xbf16> to vector<1x25x64xbf16>
    %c0_3 = arith.constant 0 : index
    %c1 = arith.constant 1 : index
    %c0_4 = arith.constant 0 : index
    %c0_5 = arith.constant 0 : index
    %2 = vector.load %arg1[%c0_3, %c1, %c0_4, %c0_5] : memref<1x4x31x64xbf16, #tpu.memory_space<vmem>>, vector<1x1x25x64xbf16>
    %3 = vector.shape_cast %2 : vector<1x1x25x64xbf16> to vector<1x25x64xbf16>
    %4 = arith.maximumf %1, %3 : vector<1x25x64xbf16>
    %c0_6 = arith.constant 0 : index
    %c0_7 = arith.constant 0 : index
    %c1_8 = arith.constant 1 : index
    %c0_9 = arith.constant 0 : index
    %5 = vector.load %arg1[%c0_6, %c0_7, %c1_8, %c0_9] : memref<1x4x31x64xbf16, #tpu.memory_space<vmem>>, vector<1x1x25x64xbf16>
    %6 = vector.shape_cast %5 : vector<1x1x25x64xbf16> to vector<1x25x64xbf16>
    %7 = arith.maximumf %4, %6 : vector<1x25x64xbf16>
    %c0_10 = arith.constant 0 : index
    %c2 = arith.constant 2 : index
    %c0_11 = arith.constant 0 : index
    %c0_12 = arith.constant 0 : index
    %8 = vector.load %arg1[%c0_10, %c2, %c0_11, %c0_12] : memref<1x4x31x64xbf16, #tpu.memory_space<vmem>>, vector<1x1x25x64xbf16>
    %9 = vector.shape_cast %8 : vector<1x1x25x64xbf16> to vector<1x25x64xbf16>
    %10 = arith.maximumf %7, %9 : vector<1x25x64xbf16>
    %c0_13 = arith.constant 0 : index
    %c3 = arith.constant 3 : index
    %c0_14 = arith.constant 0 : index
    %c0_15 = arith.constant 0 : index
    %11 = vector.load %arg1[%c0_13, %c3, %c0_14, %c0_15] : memref<1x4x31x64xbf16, #tpu.memory_space<vmem>>, vector<1x1x25x64xbf16>
    %12 = vector.shape_cast %11 : vector<1x1x25x64xbf16> to vector<1x25x64xbf16>
    %13 = arith.maximumf %10, %12 : vector<1x25x64xbf16>
    %c0_16 = arith.constant 0 : index
    %c2_17 = arith.constant 2 : index
    %c1_18 = arith.constant 1 : index
    %c0_19 = arith.constant 0 : index
    %14 = vector.load %arg1[%c0_16, %c2_17, %c1_18, %c0_19] : memref<1x4x31x64xbf16, #tpu.memory_space<vmem>>, vector<1x1x25x64xbf16>
    %15 = vector.shape_cast %14 : vector<1x1x25x64xbf16> to vector<1x25x64xbf16>
    %16 = arith.maximumf %13, %15 : vector<1x25x64xbf16>
    %c0_20 = arith.constant 0 : index
    %c0_21 = arith.constant 0 : index
    %c5 = arith.constant 5 : index
    %c0_22 = arith.constant 0 : index
    %17 = vector.load %arg1[%c0_20, %c0_21, %c5, %c0_22] : memref<1x4x31x64xbf16, #tpu.memory_space<vmem>>, vector<1x1x25x64xbf16>
    %18 = vector.shape_cast %17 : vector<1x1x25x64xbf16> to vector<1x25x64xbf16>
    %19 = arith.maximumf %16, %18 : vector<1x25x64xbf16>
    %c0_23 = arith.constant 0 : index
    %c1_24 = arith.constant 1 : index
    %c5_25 = arith.constant 5 : index
    %c0_26 = arith.constant 0 : index
    %20 = vector.load %arg1[%c0_23, %c1_24, %c5_25, %c0_26] : memref<1x4x31x64xbf16, #tpu.memory_space<vmem>>, vector<1x1x25x64xbf16>
    %21 = vector.shape_cast %20 : vector<1x1x25x64xbf16> to vector<1x25x64xbf16>
    %22 = arith.maximumf %19, %21 : vector<1x25x64xbf16>
    %c0_27 = arith.constant 0 : index
    %c0_28 = arith.constant 0 : index
    %c6 = arith.constant 6 : index
    %c0_29 = arith.constant 0 : index
    %23 = vector.load %arg1[%c0_27, %c0_28, %c6, %c0_29] : memref<1x4x31x64xbf16, #tpu.memory_space<vmem>>, vector<1x1x25x64xbf16>
    %24 = vector.shape_cast %23 : vector<1x1x25x64xbf16> to vector<1x25x64xbf16>
    %25 = arith.maximumf %22, %24 : vector<1x25x64xbf16>
    %26 = vector.shape_cast %25 : vector<1x25x64xbf16> to vector<25x64xbf16>
    %c0_30 = arith.constant 0 : index
    %c0_31 = arith.constant 0 : index
    %27 = vector.load %arg3[%c0_30, %c0_31] : memref<64x320xbf16, #tpu.memory_space<vmem>>, vector<64x320xbf16>
    %cst = arith.constant dense<0.000000e+00> : vector<25x320xf32>
    %28 = tpu.matmul %26, %27, %cst {dimension_numbers = #tpu.dot_dimension_numbers<[1], [0], [0], [1], [0, 0, 1, 1], [], []>} : vector<25x64xbf16>, vector<64x320xbf16>, vector<25x320xf32> -> vector<25x320xf32>
    %c0_32 = arith.constant 0 : index
    %c0_33 = arith.constant 0 : index
    %29 = vector.load %arg4[%c0_32, %c0_33] : memref<1x320xf32, #tpu.memory_space<vmem>>, vector<1x320xf32>
    %30 = vector.broadcast %29 : vector<1x320xf32> to vector<25x320xf32>
    %31 = arith.addf %28, %30 : vector<25x320xf32>
    %32 = vector.extract_strided_slice %31 {offsets = [0, 0], sizes = [25, 256], strides = [1, 1]} : vector<25x320xf32> to vector<25x256xf32>
    %33 = vector.extract_strided_slice %31 {offsets = [0, 256], sizes = [25, 64], strides = [1, 1]} : vector<25x320xf32> to vector<25x64xf32>
    %cst_34 = arith.constant 0.000000e+00 : f32
    %34 = vector.broadcast %cst_34 : f32 to vector<25x64xf32>
    %35 = arith.maximumf %33, %34 : vector<25x64xf32>
    %36 = arith.truncf %35 : vector<25x64xf32> to vector<25x64xbf16>
    %c0_35 = arith.constant 0 : index
    %c0_36 = arith.constant 0 : index
    %37 = vector.load %arg5[%c0_35, %c0_36] : memref<64x256xbf16, #tpu.memory_space<vmem>>, vector<64x256xbf16>
    %cst_37 = arith.constant dense<0.000000e+00> : vector<25x256xf32>
    %38 = tpu.matmul %36, %37, %cst_37 {dimension_numbers = #tpu.dot_dimension_numbers<[1], [0], [0], [1], [0, 0, 1, 1], [], []>} : vector<25x64xbf16>, vector<64x256xbf16>, vector<25x256xf32> -> vector<25x256xf32>
    %c0_38 = arith.constant 0 : index
    %c0_39 = arith.constant 0 : index
    %39 = vector.load %arg6[%c0_38, %c0_39] : memref<1x256xf32, #tpu.memory_space<vmem>>, vector<1x256xf32>
    %40 = vector.broadcast %39 : vector<1x256xf32> to vector<25x256xf32>
    %41 = arith.addf %38, %40 : vector<25x256xf32>
    %42 = arith.addf %41, %32 : vector<25x256xf32>
    %cst_40 = arith.constant 0.000000e+00 : f32
    %43 = vector.broadcast %cst_40 : f32 to vector<25x256xf32>
    %44 = arith.maximumf %42, %43 : vector<25x256xf32>
    %45 = vector.shape_cast %44 : vector<25x256xf32> to vector<1x25x256xf32>
    %c0_41 = arith.constant 0 : index
    %c0_42 = arith.constant 0 : index
    %c0_43 = arith.constant 0 : index
    %46 = vector.load %arg2[%c0_41, %c0_42, %c0_43] : memref<1x25x1xf32, #tpu.memory_space<vmem>>, vector<1x25x1xf32>
    %47 = vector.broadcast %46 : vector<1x25x1xf32> to vector<1x25x256xf32>
    %48 = arith.mulf %45, %47 : vector<1x25x256xf32>
    %cst_44 = arith.constant dense<0.000000e+00> : vector<1x256xf32>
    %49 = vector.multi_reduction <add>, %48, %cst_44 [1] : vector<1x25x256xf32> to vector<1x256xf32>
    %c0_45 = arith.constant 0 : index
    %c0_46 = arith.constant 0 : index
    %50 = vector.load %arg7[%c0_45, %c0_46] : memref<256x96xf32, #tpu.memory_space<vmem>>, vector<256x96xf32>
    %cst_47 = arith.constant dense<0.000000e+00> : vector<1x96xf32>
    %51 = tpu.matmul %49, %50, %cst_47 {dimension_numbers = #tpu.dot_dimension_numbers<[1], [0], [0], [1], [0, 0, 1, 1], [], []>} : vector<1x256xf32>, vector<256x96xf32>, vector<1x96xf32> -> vector<1x96xf32>
    %c0_48 = arith.constant 0 : index
    %c0_49 = arith.constant 0 : index
    %52 = vector.load %arg8[%c0_48, %c0_49] : memref<1x96xf32, #tpu.memory_space<vmem>>, vector<1x96xf32>
    %53 = arith.addf %51, %52 : vector<1x96xf32>
    %cst_50 = arith.constant 0.000000e+00 : f32
    %54 = vector.broadcast %cst_50 : f32 to vector<1x96xf32>
    %55 = arith.maximumf %53, %54 : vector<1x96xf32>
    %c0_51 = arith.constant 0 : index
    %c0_52 = arith.constant 0 : index
    %56 = vector.load %arg9[%c0_51, %c0_52] : memref<96x128xf32, #tpu.memory_space<vmem>>, vector<96x128xf32>
    %cst_53 = arith.constant dense<0.000000e+00> : vector<1x128xf32>
    %57 = tpu.matmul %55, %56, %cst_53 {dimension_numbers = #tpu.dot_dimension_numbers<[1], [0], [0], [1], [0, 0, 1, 1], [], []>} : vector<1x96xf32>, vector<96x128xf32>, vector<1x128xf32> -> vector<1x128xf32>
    %c0_54 = arith.constant 0 : index
    %c0_55 = arith.constant 0 : index
    %58 = vector.load %arg10[%c0_54, %c0_55] : memref<1x128xf32, #tpu.memory_space<vmem>>, vector<1x128xf32>
    %59 = arith.addf %57, %58 : vector<1x128xf32>
    %60 = vector.shape_cast %59 : vector<1x128xf32> to vector<1x1x128xf32>
    %c0_56 = arith.constant 0 : index
    %c0_57 = arith.constant 0 : index
    %c0_58 = arith.constant 0 : index
    %61 = vector.load %arg11[%c0_56, %c0_57, %c0_58] : memref<1x1x128xf32, #tpu.memory_space<vmem>>, vector<1x1x128xf32>
    tpu.vector_store %arg11[%c0_56, %c0_57, %c0_58], %60 {strides = array<i32>} : memref<1x1x128xf32, #tpu.memory_space<vmem>>, vector<1x1x128xf32>,
    return
  }
  func.func @transform_0(%arg0: i32) -> (i32, i32, i32, i32) {
    %c0_i32 = arith.constant 0 : i32
    %c0_i32_0 = arith.constant 0 : i32
    %c0_i32_1 = arith.constant 0 : i32
    %c0_i32_2 = arith.constant 0 : i32
    return %arg0, %c0_i32, %c0_i32_0, %c0_i32_1 : i32, i32, i32, i32
  }
  func.func @transform_1(%arg0: i32) -> (i32, i32, i32) {
    %c0_i32 = arith.constant 0 : i32
    %c0_i32_0 = arith.constant 0 : i32
    %c0_i32_1 = arith.constant 0 : i32
    %c0_i32_2 = arith.constant 0 : i32
    return %c0_i32, %c0_i32_0, %c0_i32_1 : i32, i32, i32
  }
  func.func @transform_2(%arg0: i32) -> (i32, i32) {
    %c0_i32 = arith.constant 0 : i32
    %c0_i32_0 = arith.constant 0 : i32
    %c0_i32_1 = arith.constant 0 : i32
    return %c0_i32, %c0_i32_0 : i32, i32
  }
  func.func @transform_3(%arg0: i32) -> (i32, i32) {
    %c0_i32 = arith.constant 0 : i32
    %c0_i32_0 = arith.constant 0 : i32
    %c0_i32_1 = arith.constant 0 : i32
    return %c0_i32, %c0_i32_0 : i32, i32
  }
  func.func @transform_4(%arg0: i32) -> (i32, i32) {
    %c0_i32 = arith.constant 0 : i32
    %c0_i32_0 = arith.constant 0 : i32
    %c0_i32_1 = arith.constant 0 : i32
    return %c0_i32, %c0_i32_0 : i32, i32
  }
  func.func @transform_5(%arg0: i32) -> (i32, i32) {
    %c0_i32 = arith.constant 0 : i32
    %c0_i32_0 = arith.constant 0 : i32
    %c0_i32_1 = arith.constant 0 : i32
    return %c0_i32, %c0_i32_0 : i32, i32
  }
  func.func @transform_6(%arg0: i32) -> (i32, i32) {
    %c0_i32 = arith.constant 0 : i32
    %c0_i32_0 = arith.constant 0 : i32
    %c0_i32_1 = arith.constant 0 : i32
    return %c0_i32, %c0_i32_0 : i32, i32
  }
  func.func @transform_7(%arg0: i32) -> (i32, i32) {
    %c0_i32 = arith.constant 0 : i32
    %c0_i32_0 = arith.constant 0 : i32
    %c0_i32_1 = arith.constant 0 : i32
    return %c0_i32, %c0_i32_0 : i32, i32
  }
  func.func @transform_8(%arg0: i32) -> (i32, i32) {
    %c0_i32 = arith.constant 0 : i32
    %c0_i32_0 = arith.constant 0 : i32
    %c0_i32_1 = arith.constant 0 : i32
    return %c0_i32, %c0_i32_0 : i32, i32
  }
  func.func @transform_9(%arg0: i32) -> (i32, i32) {
    %c0_i32 = arith.constant 0 : i32
    %c0_i32_0 = arith.constant 0 : i32
    %c0_i32_1 = arith.constant 0 : i32
    return %c0_i32, %c0_i32_0 : i32, i32
  }
  func.func @transform_10(%arg0: i32) -> (i32, i32, i32) {
    %c0_i32 = arith.constant 0 : i32
    %c0_i32_0 = arith.constant 0 : i32
    %c0_i32_1 = arith.constant 0 : i32
    return %arg0, %c0_i32, %c0_i32_0 : i32, i32, i32
  }
}

</mosaic_0001>

<llo_original>
// kernel: wangnet_forward.2
$region0: #{wangnet_forward.2}
  #allocation0 [shape = 'u32[]', space=smem, size = 0x4, offset = 0x4, fixed_abs, tag = 'smem constant byte address 0x4 - core index']
  #allocation1 [shape = 'u32[144,128]{1,0:T(1,128)}', space=vmem, size = 0x12000, scoped, tag = 'internal scratch']
  %s0 = inlined_call_operand.vmem [shape: bf16[4,11,8,28], index: 0, kind: input, shape index: {}]
  %s1 = inlined_call_operand.vmem [shape: bf16[7,28,64], index: 1, kind: input, shape index: {}]
  %s2 = inlined_call_operand.vmem [shape: f32[1,64], index: 2, kind: input, shape index: {}]
  %s3 = inlined_call_operand.vmem [shape: bf16[2,64,64], index: 3, kind: output, shape index: {}]
  %s4 = sld [smem:[#allocation0]]
  $region45: #{wangnet_forward.2} parent=0
    _
  %s6 = ssub.s32 1, %s4
  %s7 = scalar_select 0, %s6, %s4
  loop: start=0, step=1, limit=4
  $region2: #{wangnet_forward.2} parent=0 // loop_pre_header
    _
  $region3: #{wangnet_forward.2} parent=0 // loop_header
    %s9 = sphi 0, %s13
    %p10 = scmp.ge.s32.totalorder %s9, 4
    %s19 = sphi 0, %s21
    %s22 = sphi 0, %s19
    %s23 = sphi 0, %s22
    %s39 = sphi 0, %s23
    %s43 = sphi 0, %s43
    %s45 = sphi 0, %s43
    %s46 = sphi 0, %s45
    %s60 = sphi 0, %s46
    %s64 = sphi 0, %s64
    %s66 = sphi 0, %s64
    %s67 = sphi 0, %s66
    %s81 = sphi 0, %s67
    %s87 = sphi 0, %s89
    %s90 = sphi 0, %s87
    %s91 = sphi 0, %s90
    %s107 = sphi 0, %s91
  $region4: #{wangnet_forward.2} parent=0 // loop_header_branch
    %12 = sbr.rel (%p10) target = $region8
  $region5: #{wangnet_forward.2} parent=0 // loop_body
    %s14 = ssub.s32 %s9, 1
    %s15 = ssub.s32 %s9, 2
    %s16 = sadd.s32 %s9, 1
    %s17 = ssub.s32 %s9, %s16
    %p18 = scmp.eq.s32.totalorder %s17, 0
    %s20 = sadd.s32 %s19, 1
    %s21 = scalar_select %p18, %s19, %s20
    %p24 = pneg %p18
    %p25 = scmp.eq.s32.totalorder %s9, 1
    %p26 = por %p24, %p25
    %p27 = scmp.ne.s32.totalorder %s19, %s22
    %p28 = scmp.eq.s32.totalorder %s9, 0
    %p29 = por %p27, %p28
    %p30 = scmp.ne.s32.totalorder %s19, %s22
    %p31 = scmp.eq.s32.totalorder %s14, 1
    %p32 = por %p30, %p31
    %p33 = scmp.ne.s32.totalorder %s22, %s23
    %p34 = scmp.eq.s32.totalorder %s14, 0
    %p35 = por %p33, %p34
    %p36 = scmp.ne.s32.totalorder %s22, %s23
    %p37 = scmp.eq.s32.totalorder %s15, 1
    %p38 = por %p36, %p37
    %p40 = scmp.ne.s32.totalorder %s23, %s39
    %p41 = scmp.eq.s32.totalorder %s15, 0
    %p42 = por %p40, %p41
    %s44 = sadd.s32 %s43, 1
    %p47 = scmp.eq.s32.totalorder %s9, 1
    %p48 = scmp.ne.s32.totalorder %s43, %s45
    %p49 = scmp.eq.s32.totalorder %s9, 0
    %p50 = por %p48, %p49
    %p51 = scmp.ne.s32.totalorder %s43, %s45
    %p52 = scmp.eq.s32.totalorder %s14, 1
    %p53 = por %p51, %p52
    %p54 = scmp.ne.s32.totalorder %s45, %s46
    %p55 = scmp.eq.s32.totalorder %s14, 0
    %p56 = por %p54, %p55
    %p57 = scmp.ne.s32.totalorder %s45, %s46
    %p58 = scmp.eq.s32.totalorder %s15, 1
    %p59 = por %p57, %p58
    %p61 = scmp.ne.s32.totalorder %s46, %s60
    %p62 = scmp.eq.s32.totalorder %s15, 0
    %p63 = por %p61, %p62
    %s65 = sadd.s32 %s64, 1
    %p68 = scmp.eq.s32.totalorder %s9, 1
    %p69 = scmp.ne.s32.totalorder %s64, %s66
    %p70 = scmp.eq.s32.totalorder %s9, 0
    %p71 = por %p69, %p70
    %p72 = scmp.ne.s32.totalorder %s64, %s66
    %p73 = scmp.eq.s32.totalorder %s14, 1
    %p74 = por %p72, %p73
    %p75 = scmp.ne.s32.totalorder %s66, %s67
    %p76 = scmp.eq.s32.totalorder %s14, 0
    %p77 = por %p75, %p76
    %p78 = scmp.ne.s32.totalorder %s66, %s67
    %p79 = scmp.eq.s32.totalorder %s15, 1
    %p80 = por %p78, %p79
    %p82 = scmp.ne.s32.totalorder %s67, %s81
    %p83 = scmp.eq.s32.totalorder %s15, 0
    %p84 = por %p82, %p83
    %s85 = ssub.s32 %s9, %s16
    %p86 = scmp.eq.s32.totalorder %s85, 0
    %s88 = sadd.s32 %s87, 1
    %s89 = scalar_select %p86, %s87, %s88
    %p92 = pneg %p86
    %p93 = scmp.eq.s32.totalorder %s9, 1
    %p94 = por %p92, %p93
    %p95 = scmp.ne.s32.totalorder %s87, %s90
    %p96 = scmp.eq.s32.totalorder %s9, 0
    %p97 = por %p95, %p96
    %p98 = scmp.ne.s32.totalorder %s87, %s90
    %p99 = scmp.eq.s32.totalorder %s14, 1
    %p100 = por %p98, %p99
    %p101 = scmp.ne.s32.totalorder %s90, %s91
    %p102 = scmp.eq.s32.totalorder %s14, 0
    %p103 = por %p101, %p102
    %p104 = scmp.ne.s32.totalorder %s90, %s91
    %p105 = scmp.eq.s32.totalorder %s15, 1
    %p106 = por %p104, %p105
    %p108 = scmp.ne.s32.totalorder %s91, %s107
    %p109 = scmp.eq.s32.totalorder %s15, 0
    %p110 = por %p108, %p109
    %p111 = scmp.le.s32.totalorder 1, %s9
    %p112 = scmp.lt.s32.totalorder %s9, 3
    %p113 = pnand %p111, %p112
    %p114 = pneg %p113
    // Predicated region
    $region9: #{wangnet_forward.2} parent=5 // pred_check
      _
    $region10: #{wangnet_forward.2} parent=5 // pred_check_branch
      %116 = sbr.rel (%p113) target = $region12
    $region11: #{wangnet_forward.2} parent=5 // pred_region
      %s117 = ssub.s32 %s9, 1
      // Predicated region
      $region13: #{wangnet_forward.2} parent=11 // pred_check
        %p118 = pneg %p56
      $region14: #{wangnet_forward.2} parent=11 // pred_check_branch
        %120 = sbr.rel (%p118) target = $region16
      $region15: #{wangnet_forward.2} parent=11 // pred_region
        _
      $region16: #{wangnet_forward.2} parent=11 // pred_fallthru
        _
      // Predicated region
      $region17: #{wangnet_forward.2} parent=11 // pred_check
        %p121 = pneg %p77
      $region18: #{wangnet_forward.2} parent=11 // pred_check_branch
        %123 = sbr.rel (%p121) target = $region20
      $region19: #{wangnet_forward.2} parent=11 // pred_region
        _
      $region20: #{wangnet_forward.2} parent=11 // pred_fallthru
        _
    $region12: #{wangnet_forward.2} parent=5 // pred_fallthru
      _
    %p124 = scmp.lt.s32.totalorder %s9, 2
    // Predicated region
    $region21: #{wangnet_forward.2} parent=5 // pred_check
      %p125 = pneg %p124
    $region22: #{wangnet_forward.2} parent=5 // pred_check_branch
      %127 = sbr.rel (%p125) target = $region24
    $region23: #{wangnet_forward.2} parent=5 // pred_region
      // Predicated region
      $region25: #{wangnet_forward.2} parent=23 // pred_check
        %p128 = pneg %p29
      $region26: #{wangnet_forward.2} parent=23 // pred_check_branch
        %130 = sbr.rel (%p128) target = $region28
      $region27: #{wangnet_forward.2} parent=23 // pred_region
        %s131 = smul.u32 2, %s9
        %p132 = scmp.lt.s32.totalorder %s131, 3
        %s133 = scalar_select %p132, %s131, 3
        %s134 = smul.addr %s133, 11
        %s135 = smul.addr %s134, 4
        %s136 = scalar_lea.vmem %s0, %s135
        %s137 = smul.u32 2, %s9
      $region28: #{wangnet_forward.2} parent=23 // pred_fallthru
        _
    $region24: #{wangnet_forward.2} parent=5 // pred_fallthru
      _
    %p138 = scmp.le.s32.totalorder 1, %s9
    %p139 = scmp.lt.s32.totalorder %s9, 3
    %p140 = pnand %p138, %p139
    %p141 = pneg %p140
    // Predicated region
    $region29: #{wangnet_forward.2} parent=5 // pred_check
      _
    $region30: #{wangnet_forward.2} parent=5 // pred_check_branch
      %143 = sbr.rel (%p140) target = $region32
    $region31: #{wangnet_forward.2} parent=5 // pred_region
      %s144 = ssub.s32 %s9, 1
      %s145 = smul.u32 2, %s14
      %p146 = scmp.lt.s32.totalorder %s145, 3
      %s147 = scalar_select %p146, %s145, 3
      %s148 = smul.addr %s147, 11
      %s149 = smul.addr %s148, 4
      %s150 = scalar_lea.vmem %s0, %s149
      %p151 = pneg %p35
      %p152 = pneg %p32
      %p153 = pneg %p56
      %p154 = pneg %p53
      %p155 = pneg %p77
      %p156 = pneg %p74
      %p157 = pneg %p103
      %p158 = pneg %p100
      %p159 = scmp.lt.s32.totalorder %s14, 1
      %s160 = scalar_select %p159, %s14, 1
      %s161 = smul.addr %s160, 8
      %s162 = smul.addr %s161, 4
      %s163 = scalar_lea.vmem %s3, %s162
      %s164 = smul.u32 2, %s14
      %p165 = scmp.lt.s32.totalorder %s164, 3
      %s166 = scalar_select %p165, %s164, 3
      %s167 = smul.addr %s166, 11
      %s168 = smul.addr %s167, 4
      %s169 = scalar_lea.vmem %s0, %s168
      %s170 = smul.u32 2, %s14
      %p171 = scmp.lt.s32.totalorder %s14, 1
      %s172 = scalar_select %p171, %s14, 1
      %s173 = smul.addr %s172, 8
      %s174 = smul.addr %s173, 4
      %s175 = scalar_lea.vmem %s3, %s174
      %v177 = vld [vmem:[%s169] sm:$0xf]
      %v178 = vld [vmem:[%s169 + $0x4] sm:$0xf]
      %v179 = vld [vmem:[%s169 + $0x8] sm:$0xf]
      %v180 = vld [vmem:[%s169 + $0xc] sm:$0xf]
      %v181 = vld [vmem:[%s169 + $0x10] sm:$0xf]
      %v182 = vld [vmem:[%s169 + $0x14] sm:$0xf]
      %v183 = vld [vmem:[%s169 + $0x18] sm:$0xf]
      %v184 = vld [vmem:[%s169 + $0x1c] sm:$0xf]
      %v185 = vld [vmem:[%s1] sm:$0xf]
      %v186 = vld [vmem:[%s1 + $0x4] sm:$0xf]
      %v187 = vld [vmem:[%s1 + $0x8] sm:$0xf]
      %v188 = vld [vmem:[%s1 + $0xc] sm:$0x3]
      %s189 = scalar_lea.vmem %s169, 44
      %v190 = vld [vmem:[%s189] sm:$0xf]
      %v191 = vld [vmem:[%s189 + $0x4] sm:$0xf]
      %v192 = vld [vmem:[%s189 + $0x8] sm:$0xf]
      %v193 = vld [vmem:[%s189 + $0xc] sm:$0xf]
      %v194 = vld [vmem:[%s189 + $0x10] sm:$0xf]
      %v195 = vld [vmem:[%s189 + $0x14] sm:$0xf]
      %v196 = vld [vmem:[%s189 + $0x18] sm:$0xf]
      %v197 = vld [vmem:[%s189 + $0x1c] sm:$0xf]
      %s198 = scalar_lea.vmem %s1, 16
      %v199 = vld [vmem:[%s198] sm:$0xf]
      %v200 = vld [vmem:[%s198 + $0x4] sm:$0xf]
      %v201 = vld [vmem:[%s198 + $0x8] sm:$0xf]
      %v202 = vld [vmem:[%s198 + $0xc] sm:$0x3]
      %v211 = vunpack.c.l.b16 %v190
      %v212 = vunpack.c.l.b16 %v191
      %v213 = vunpack.c.l.b16 %v192
      %v214 = vunpack.c.l.b16 %v193
      %v215 = vunpack.c.l.b16 %v194
      %v216 = vunpack.c.l.b16 %v195
      %v217 = vunpack.c.l.b16 %v196
      %v218 = vunpack.c.l.b16 %v197
      %v219 = vpack.c.b16 %v212, %v211
      %v220 = vpack.c.b16 %v214, %v213
      %v221 = vpack.c.b16 %v216, %v215
      %v222 = vpack.c.b16 %v218, %v217
      %v227 = vunpack.c.l.b16 %v199
      %v228 = vunpack.c.l.b16 %v200
      %v229 = vunpack.c.l.b16 %v201
      %v230 = vunpack.c.l.b16 %v202
      %v231 = vpack.c.b16 %v228, %v227
      %v232 = vpack.c.b16 %v230, %v229
      %vm234 = vcmask 228352
      %v236 = vsel %vm234, %v219, 0
      %v239 = vsel %vm234, %v220, 0
      %v242 = vsel %vm234, %v221, 0
      %v245 = vsel %vm234, %v222, 0
      %vm247 = vcmask 1045504
      %v249 = vsel %vm247, %v232, 0
      %251 = vmatprep.subr.bf16.mxu0 0
      %252 = vmatpush1.bf16.msra.mxu0 %v231
      %253 = vmatprep.subr.bf16.mxu0 0
      %254 = vmatpush1.bf16.msra.mxu0 %v249
      %255 = vmatprep.subr.bf16.mxu0 0
      %256 = vmatpush1.bf16.msra.mxu0 0
      %257 = vmatprep.subr.bf16.mxu0 0
      %258 = vmatpush1.bf16.msra.mxu0 0
      %259 = vmatprep.subr.bf16.mxu0 0
      %260 = vmatpush1.bf16.msra.mxu0 0
      %261 = vmatprep.subr.bf16.mxu0 0
      %262 = vmatpush1.bf16.msra.mxu0 0
      %263 = vmatprep.subr.bf16.mxu0 0
      %264 = vmatpush1.bf16.msra.mxu0 0
      %265 = vmatprep.subr.bf16.mxu0 0
      %266 = vmatpush1.bf16.msra.mxu0 0
      %267 = vmatprep.subr.bf16.mxu0 0
      %268 = vmatpush1.bf16.msra.mxu0 0
      %269 = vmatprep.subr.bf16.mxu0 0
      %270 = vmatpush1.bf16.msra.mxu0 0
      %271 = vmatprep.subr.bf16.mxu0 0
      %272 = vmatpush1.bf16.msra.mxu0 0
      %273 = vmatprep.subr.bf16.mxu0 0
      %274 = vmatpush1.bf16.msra.mxu0 0
      %275 = vmatprep.subr.bf16.mxu0 0
      %276 = vmatpush1.bf16.msra.mxu0 0
      %277 = vmatprep.subr.bf16.mxu0 0
      %278 = vmatpush1.bf16.msra.mxu0 0
      %279 = vmatprep.subr.bf16.mxu0 0
      %280 = vmatpush1.bf16.msra.mxu0 0
      %281 = vmatprep.subr.bf16.mxu0 0
      %282 = vmatpush1.bf16.msra.mxu0 0
      %283 = vmatprep.mubr.bf16.mxu0 0
      %284 = vmatmul.mubr.bf16.gmra.mrb[0].mxu0 %v236
      %v285 = vpop.f32.mrb[0].mxu0
      %v286 = vadd.f32 0.0, %v285
      %v287 = vpop.f32.mrb[0].mxu0
      %v288 = vpop.f32.mrb[0].mxu0
      %v289 = vadd.f32 0.0, %v288
      %v290 = vpop.f32.mrb[0].mxu0
      %291 = vmatprep.mubr.bf16.mxu0 0
      %292 = vmatmul.mubr.bf16.gmra.mrb[0].mxu0 %v239
      %v293 = vpop.f32.mrb[0].mxu0
      %v294 = vadd.f32 0.0, %v293
      %v295 = vpop.f32.mrb[0].mxu0
      %v296 = vpop.f32.mrb[0].mxu0
      %v297 = vadd.f32 0.0, %v296
      %v298 = vpop.f32.mrb[0].mxu0
      %299 = vmatprep.mubr.bf16.mxu0 0
      %300 = vmatmul.mubr.bf16.gmra.mrb[0].mxu0 %v242
      %v301 = vpop.f32.mrb[0].mxu0
      %v302 = vadd.f32 0.0, %v301
      %v303 = vpop.f32.mrb[0].mxu0
      %v304 = vpop.f32.mrb[0].mxu0
      %v305 = vadd.f32 0.0, %v304
      %v306 = vpop.f32.mrb[0].mxu0
      %307 = vmatprep.mubr.bf16.mxu0 0
      %308 = vmatmul.mubr.bf16.gmra.mrb[0].mxu0 %v245
      %v309 = vpop.f32.mrb[0].mxu0
      %v310 = vadd.f32 0.0, %v309
      %v311 = vpop.f32.mrb[0].mxu0
      %v312 = vpop.f32.mrb[0].mxu0
      %v313 = vadd.f32 0.0, %v312
      %v314 = vpop.f32.mrb[0].mxu0
      %315 = vdwg.mxu0
      %v324 = vunpack.c.l.b16 %v177
      %v325 = vunpack.c.l.b16 %v178
      %v326 = vunpack.c.l.b16 %v179
      %v327 = vunpack.c.l.b16 %v180
      %v328 = vunpack.c.l.b16 %v181
      %v329 = vunpack.c.l.b16 %v182
      %v330 = vunpack.c.l.b16 %v183
      %v331 = vunpack.c.l.b16 %v184
      %v332 = vpack.c.b16 %v325, %v324
      %v333 = vpack.c.b16 %v327, %v326
      %v334 = vpack.c.b16 %v329, %v328
      %v335 = vpack.c.b16 %v331, %v330
      %v340 = vunpack.c.l.b16 %v185
      %v341 = vunpack.c.l.b16 %v186
      %v342 = vunpack.c.l.b16 %v187
      %v343 = vunpack.c.l.b16 %v188
      %v344 = vpack.c.b16 %v341, %v340
      %v345 = vpack.c.b16 %v343, %v342
      %v348 = vsel %vm234, %v332, 0
      %v351 = vsel %vm234, %v333, 0
      %v354 = vsel %vm234, %v334, 0
      %v357 = vsel %vm234, %v335, 0
      %v360 = vsel %vm247, %v345, 0
      %362 = vmatprep.subr.bf16.mxu0 0
      %363 = vmatpush1.bf16.msra.mxu0 %v344
      %364 = vmatprep.subr.bf16.mxu0 0
      %365 = vmatpush1.bf16.msra.mxu0 %v360
      %366 = vmatprep.subr.bf16.mxu0 0
      %367 = vmatpush1.bf16.msra.mxu0 0
      %368 = vmatprep.subr.bf16.mxu0 0
      %369 = vmatpush1.bf16.msra.mxu0 0
      %370 = vmatprep.subr.bf16.mxu0 0
      %371 = vmatpush1.bf16.msra.mxu0 0
      %372 = vmatprep.subr.bf16.mxu0 0
      %373 = vmatpush1.bf16.msra.mxu0 0
      %374 = vmatprep.subr.bf16.mxu0 0
      %375 = vmatpush1.bf16.msra.mxu0 0
      %376 = vmatprep.subr.bf16.mxu0 0
      %377 = vmatpush1.bf16.msra.mxu0 0
      %378 = vmatprep.subr.bf16.mxu0 0
      %379 = vmatpush1.bf16.msra.mxu0 0
      %380 = vmatprep.subr.bf16.mxu0 0
      %381 = vmatpush1.bf16.msra.mxu0 0
      %382 = vmatprep.subr.bf16.mxu0 0
      %383 = vmatpush1.bf16.msra.mxu0 0
      %384 = vmatprep.subr.bf16.mxu0 0
      %385 = vmatpush1.bf16.msra.mxu0 0
      %386 = vmatprep.subr.bf16.mxu0 0
      %387 = vmatpush1.bf16.msra.mxu0 0
      %388 = vmatprep.subr.bf16.mxu0 0
      %389 = vmatpush1.bf16.msra.mxu0 0
      %390 = vmatprep.subr.bf16.mxu0 0
      %391 = vmatpush1.bf16.msra.mxu0 0
      %392 = vmatprep.subr.bf16.mxu0 0
      %393 = vmatpush1.bf16.msra.mxu0 0
      %394 = vmatprep.mubr.bf16.mxu0 0
      %395 = vmatmul.mubr.bf16.gmra.mrb[0].mxu0 %v348
      %v396 = vpop.f32.mrb[0].mxu0
      %v397 = vadd.f32 %v286, %v396
      %v398 = vpop.f32.mrb[0].mxu0
      %v399 = vpop.f32.mrb[0].mxu0
      %v400 = vadd.f32 %v289, %v399
      %v401 = vpop.f32.mrb[0].mxu0
      %402 = vmatprep.mubr.bf16.mxu0 0
      %403 = vmatmul.mubr.bf16.gmra.mrb[0].mxu0 %v351
      %v404 = vpop.f32.mrb[0].mxu0
      %v405 = vadd.f32 %v294, %v404
      %v406 = vpop.f32.mrb[0].mxu0
      %v407 = vpop.f32.mrb[0].mxu0
      %v408 = vadd.f32 %v297, %v407
      %v409 = vpop.f32.mrb[0].mxu0
      %410 = vmatprep.mubr.bf16.mxu0 0
      %411 = vmatmul.mubr.bf16.gmra.mrb[0].mxu0 %v354
      %v412 = vpop.f32.mrb[0].mxu0
      %v413 = vadd.f32 %v302, %v412
      %v414 = vpop.f32.mrb[0].mxu0
      %v415 = vpop.f32.mrb[0].mxu0
      %v416 = vadd.f32 %v305, %v415
      %v417 = vpop.f32.mrb[0].mxu0
      %418 = vmatprep.mubr.bf16.mxu0 0
      %419 = vmatmul.mubr.bf16.gmra.mrb[0].mxu0 %v357
      %v420 = vpop.f32.mrb[0].mxu0
      %v421 = vadd.f32 %v310, %v420
      %v422 = vpop.f32.mrb[0].mxu0
      %v423 = vpop.f32.mrb[0].mxu0
      %v424 = vadd.f32 %v313, %v423
      %v425 = vpop.f32.mrb[0].mxu0
      %426 = vdwg.mxu0
      %s427 = scalar_lea.vmem %s169, 4
      %v428 = vld [vmem:[%s427] sm:$0xf]
      %v429 = vld [vmem:[%s427 + $0x4] sm:$0xf]
      %v430 = vld [vmem:[%s427 + $0x8] sm:$0xf]
      %v431 = vld [vmem:[%s427 + $0xc] sm:$0xf]
      %v432 = vld [vmem:[%s427 + $0x10] sm:$0xf]
      %v433 = vld [vmem:[%s427 + $0x14] sm:$0xf]
      %v434 = vld [vmem:[%s427 + $0x18] sm:$0xf]
      %v435 = vld [vmem:[%s427 + $0x1c] sm:$0xf]
      %s436 = scalar_lea.vmem %s1, 32
      %v437 = vld [vmem:[%s436] sm:$0xf]
      %v438 = vld [vmem:[%s436 + $0x4] sm:$0xf]
      %v439 = vld [vmem:[%s436 + $0x8] sm:$0xf]
      %v440 = vld [vmem:[%s436 + $0xc] sm:$0x3]
      %v449 = vunpack.c.l.b16 %v428
      %v450 = vunpack.c.l.b16 %v429
      %v451 = vunpack.c.l.b16 %v430
      %v452 = vunpack.c.l.b16 %v431
      %v453 = vunpack.c.l.b16 %v432
      %v454 = vunpack.c.l.b16 %v433
      %v455 = vunpack.c.l.b16 %v434
      %v456 = vunpack.c.l.b16 %v435
      %v457 = vpack.c.b16 %v450, %v449
      %v458 = vpack.c.b16 %v452, %v451
      %v459 = vpack.c.b16 %v454, %v453
      %v460 = vpack.c.b16 %v456, %v455
      %v465 = vunpack.c.l.b16 %v437
      %v466 = vunpack.c.l.b16 %v438
      %v467 = vunpack.c.l.b16 %v439
      %v468 = vunpack.c.l.b16 %v440
      %v469 = vpack.c.b16 %v466, %v465
      %v470 = vpack.c.b16 %v468, %v467
      %v473 = vsel %vm234, %v457, 0
      %v476 = vsel %vm234, %v458, 0
      %v479 = vsel %vm234, %v459, 0
      %v482 = vsel %vm234, %v460, 0
      %v485 = vsel %vm247, %v470, 0
      %487 = vmatprep.subr.bf16.mxu0 0
      %488 = vmatpush1.bf16.msra.mxu0 %v469
      %489 = vmatprep.subr.bf16.mxu0 0
      %490 = vmatpush1.bf16.msra.mxu0 %v485
      %491 = vmatprep.subr.bf16.mxu0 0
      %492 = vmatpush1.bf16.msra.mxu0 0
      %493 = vmatprep.subr.bf16.mxu0 0
      %494 = vmatpush1.bf16.msra.mxu0 0
      %495 = vmatprep.subr.bf16.mxu0 0
      %496 = vmatpush1.bf16.msra.mxu0 0
      %497 = vmatprep.subr.bf16.mxu0 0
      %498 = vmatpush1.bf16.msra.mxu0 0
      %499 = vmatprep.subr.bf16.mxu0 0
      %500 = vmatpush1.bf16.msra.mxu0 0
      %501 = vmatprep.subr.bf16.mxu0 0
      %502 = vmatpush1.bf16.msra.mxu0 0
      %503 = vmatprep.subr.bf16.mxu0 0
      %504 = vmatpush1.bf16.msra.mxu0 0
      %505 = vmatprep.subr.bf16.mxu0 0
      %506 = vmatpush1.bf16.msra.mxu0 0
      %507 = vmatprep.subr.bf16.mxu0 0
      %508 = vmatpush1.bf16.msra.mxu0 0
      %509 = vmatprep.subr.bf16.mxu0 0
      %510 = vmatpush1.bf16.msra.mxu0 0
      %511 = vmatprep.subr.bf16.mxu0 0
      %512 = vmatpush1.bf16.msra.mxu0 0
      %513 = vmatprep.subr.bf16.mxu0 0
      %514 = vmatpush1.bf16.msra.mxu0 0
      %515 = vmatprep.subr.bf16.mxu0 0
      %516 = vmatpush1.bf16.msra.mxu0 0
      %517 = vmatprep.subr.bf16.mxu0 0
      %518 = vmatpush1.bf16.msra.mxu0 0
      %519 = vmatprep.mubr.bf16.mxu0 0
      %520 = vmatmul.mubr.bf16.gmra.mrb[0].mxu0 %v473
      %v521 = vpop.f32.mrb[0].mxu0
      %v522 = vadd.f32 0.0, %v521
      %v523 = vpop.f32.mrb[0].mxu0
      %v524 = vpop.f32.mrb[0].mxu0
      %v525 = vadd.f32 0.0, %v524
      %v526 = vpop.f32.mrb[0].mxu0
      %527 = vmatprep.mubr.bf16.mxu0 0
      %528 = vmatmul.mubr.bf16.gmra.mrb[0].mxu0 %v476
      %v529 = vpop.f32.mrb[0].mxu0
      %v530 = vadd.f32 0.0, %v529
      %v531 = vpop.f32.mrb[0].mxu0
      %v532 = vpop.f32.mrb[0].mxu0
      %v533 = vadd.f32 0.0, %v532
      %v534 = vpop.f32.mrb[0].mxu0
      %535 = vmatprep.mubr.bf16.mxu0 0
      %536 = vmatmul.mubr.bf16.gmra.mrb[0].mxu0 %v479
      %v537 = vpop.f32.mrb[0].mxu0
      %v538 = vadd.f32 0.0, %v537
      %v539 = vpop.f32.mrb[0].mxu0
      %v540 = vpop.f32.mrb[0].mxu0
      %v541 = vadd.f32 0.0, %v540
      %v542 = vpop.f32.mrb[0].mxu0
      %543 = vmatprep.mubr.bf16.mxu0 0
      %544 = vmatmul.mubr.bf16.gmra.mrb[0].mxu0 %v482
      %v545 = vpop.f32.mrb[0].mxu0
      %v546 = vadd.f32 0.0, %v545
      %v547 = vpop.f32.mrb[0].mxu0
      %v548 = vpop.f32.mrb[0].mxu0
      %v549 = vadd.f32 0.0, %v548
      %v550 = vpop.f32.mrb[0].mxu0
      %551 = vdwg.mxu0
      %v552 = vadd.f32 %v397, %v522
      %v553 = vadd.f32 %v400, %v525
      %v554 = vadd.f32 %v405, %v530
      %v555 = vadd.f32 %v408, %v533
      %v556 = vadd.f32 %v413, %v538
      %v557 = vadd.f32 %v416, %v541
      %v558 = vadd.f32 %v421, %v546
      %v559 = vadd.f32 %v424, %v549
      %s560 = scalar_lea.vmem %s169, 48
      %v561 = vld [vmem:[%s560] sm:$0xf]
      %v562 = vld [vmem:[%s560 + $0x4] sm:$0xf]
      %v563 = vld [vmem:[%s560 + $0x8] sm:$0xf]
      %v564 = vld [vmem:[%s560 + $0xc] sm:$0xf]
      %v565 = vld [vmem:[%s560 + $0x10] sm:$0xf]
      %v566 = vld [vmem:[%s560 + $0x14] sm:$0xf]
      %v567 = vld [vmem:[%s560 + $0x18] sm:$0xf]
      %v568 = vld [vmem:[%s560 + $0x1c] sm:$0xf]
      %s569 = scalar_lea.vmem %s1, 48
      %v570 = vld [vmem:[%s569] sm:$0xf]
      %v571 = vld [vmem:[%s569 + $0x4] sm:$0xf]
      %v572 = vld [vmem:[%s569 + $0x8] sm:$0xf]
      %v573 = vld [vmem:[%s569 + $0xc] sm:$0x3]
      %v582 = vunpack.c.l.b16 %v561
      %v583 = vunpack.c.l.b16 %v562
      %v584 = vunpack.c.l.b16 %v563
      %v585 = vunpack.c.l.b16 %v564
      %v586 = vunpack.c.l.b16 %v565
      %v587 = vunpack.c.l.b16 %v566
      %v588 = vunpack.c.l.b16 %v567
      %v589 = vunpack.c.l.b16 %v568
      %v590 = vpack.c.b16 %v583, %v582
      %v591 = vpack.c.b16 %v585, %v584
      %v592 = vpack.c.b16 %v587, %v586
      %v593 = vpack.c.b16 %v589, %v588
      %v598 = vunpack.c.l.b16 %v570
      %v599 = vunpack.c.l.b16 %v571
      %v600 = vunpack.c.l.b16 %v572
      %v601 = vunpack.c.l.b16 %v573
      %v602 = vpack.c.b16 %v599, %v598
      %v603 = vpack.c.b16 %v601, %v600
      %v606 = vsel %vm234, %v590, 0
      %v609 = vsel %vm234, %v591, 0
      %v612 = vsel %vm234, %v592, 0
      %v615 = vsel %vm234, %v593, 0
      %v618 = vsel %vm247, %v603, 0
      %620 = vmatprep.subr.bf16.mxu0 0
      %621 = vmatpush1.bf16.msra.mxu0 %v602
      %622 = vmatprep.subr.bf16.mxu0 0
      %623 = vmatpush1.bf16.msra.mxu0 %v618
      %624 = vmatprep.subr.bf16.mxu0 0
      %625 = vmatpush1.bf16.msra.mxu0 0
      %626 = vmatprep.subr.bf16.mxu0 0
      %627 = vmatpush1.bf16.msra.mxu0 0
      %628 = vmatprep.subr.bf16.mxu0 0
      %629 = vmatpush1.bf16.msra.mxu0 0
      %630 = vmatprep.subr.bf16.mxu0 0
      %631 = vmatpush1.bf16.msra.mxu0 0
      %632 = vmatprep.subr.bf16.mxu0 0
      %633 = vmatpush1.bf16.msra.mxu0 0
      %634 = vmatprep.subr.bf16.mxu0 0
      %635 = vmatpush1.bf16.msra.mxu0 0
      %636 = vmatprep.subr.bf16.mxu0 0
      %637 = vmatpush1.bf16.msra.mxu0 0
      %638 = vmatprep.subr.bf16.mxu0 0
      %639 = vmatpush1.bf16.msra.mxu0 0
      %640 = vmatprep.subr.bf16.mxu0 0
      %641 = vmatpush1.bf16.msra.mxu0 0
      %642 = vmatprep.subr.bf16.mxu0 0
      %643 = vmatpush1.bf16.msra.mxu0 0
      %644 = vmatprep.subr.bf16.mxu0 0
      %645 = vmatpush1.bf16.msra.mxu0 0
      %646 = vmatprep.subr.bf16.mxu0 0
      %647 = vmatpush1.bf16.msra.mxu0 0
      %648 = vmatprep.subr.bf16.mxu0 0
      %649 = vmatpush1.bf16.msra.mxu0 0
      %650 = vmatprep.subr.bf16.mxu0 0
      %651 = vmatpush1.bf16.msra.mxu0 0
      %652 = vmatprep.mubr.bf16.mxu0 0
      %653 = vmatmul.mubr.bf16.gmra.mrb[0].mxu0 %v606
      %v654 = vpop.f32.mrb[0].mxu0
      %v655 = vadd.f32 0.0, %v654
      %v656 = vpop.f32.mrb[0].mxu0
      %v657 = vpop.f32.mrb[0].mxu0
      %v658 = vadd.f32 0.0, %v657
      %v659 = vpop.f32.mrb[0].mxu0
      %660 = vmatprep.mubr.bf16.mxu0 0
      %661 = vmatmul.mubr.bf16.gmra.mrb[0].mxu0 %v609
      %v662 = vpop.f32.mrb[0].mxu0
      %v663 = vadd.f32 0.0, %v662
      %v664 = vpop.f32.mrb[0].mxu0
      %v665 = vpop.f32.mrb[0].mxu0
      %v666 = vadd.f32 0.0, %v665
      %v667 = vpop.f32.mrb[0].mxu0
      %668 = vmatprep.mubr.bf16.mxu0 0
      %669 = vmatmul.mubr.bf16.gmra.mrb[0].mxu0 %v612
      %v670 = vpop.f32.mrb[0].mxu0
      %v671 = vadd.f32 0.0, %v670
      %v672 = vpop.f32.mrb[0].mxu0
      %v673 = vpop.f32.mrb[0].mxu0
      %v674 = vadd.f32 0.0, %v673
      %v675 = vpop.f32.mrb[0].mxu0
      %676 = vmatprep.mubr.bf16.mxu0 0
      %677 = vmatmul.mubr.bf16.gmra.mrb[0].mxu0 %v615
      %v678 = vpop.f32.mrb[0].mxu0
      %v679 = vadd.f32 0.0, %v678
      %v680 = vpop.f32.mrb[0].mxu0
      %v681 = vpop.f32.mrb[0].mxu0
      %v682 = vadd.f32 0.0, %v681
      %v683 = vpop.f32.mrb[0].mxu0
      %684 = vdwg.mxu0
      %v685 = vadd.f32 %v552, %v655
      %v686 = vadd.f32 %v553, %v658
      %v687 = vadd.f32 %v554, %v663
      %v688 = vadd.f32 %v555, %v666
      %v689 = vadd.f32 %v556, %v671
      %v690 = vadd.f32 %v557, %v674
      %v691 = vadd.f32 %v558, %v679
      %v692 = vadd.f32 %v559, %v682
      %s693 = scalar_lea.vmem %s169, 8
      %v694 = vld [vmem:[%s693] sm:$0xf]
      %v695 = vld [vmem:[%s693 + $0x4] sm:$0xf]
      %v696 = vld [vmem:[%s693 + $0x8] sm:$0xf]
      %v697 = vld [vmem:[%s693 + $0xc] sm:$0xf]
      %v698 = vld [vmem:[%s693 + $0x10] sm:$0xf]
      %v699 = vld [vmem:[%s693 + $0x14] sm:$0xf]
      %v700 = vld [vmem:[%s693 + $0x18] sm:$0xf]
      %v701 = vld [vmem:[%s693 + $0x1c] sm:$0xf]
      %s702 = scalar_lea.vmem %s1, 64
      %v703 = vld [vmem:[%s702] sm:$0xf]
      %v704 = vld [vmem:[%s702 + $0x4] sm:$0xf]
      %v705 = vld [vmem:[%s702 + $0x8] sm:$0xf]
      %v706 = vld [vmem:[%s702 + $0xc] sm:$0x3]
      %v715 = vunpack.c.l.b16 %v694
      %v716 = vunpack.c.l.b16 %v695
      %v717 = vunpack.c.l.b16 %v696
      %v718 = vunpack.c.l.b16 %v697
      %v719 = vunpack.c.l.b16 %v698
      %v720 = vunpack.c.l.b16 %v699
      %v721 = vunpack.c.l.b16 %v700
      %v722 = vunpack.c.l.b16 %v701
      %v723 = vpack.c.b16 %v716, %v715
      %v724 = vpack.c.b16 %v718, %v717
      %v725 = vpack.c.b16 %v720, %v719
      %v726 = vpack.c.b16 %v722, %v721
      %v731 = vunpack.c.l.b16 %v703
      %v732 = vunpack.c.l.b16 %v704
      %v733 = vunpack.c.l.b16 %v705
      %v734 = vunpack.c.l.b16 %v706
      %v735 = vpack.c.b16 %v732, %v731
      %v736 = vpack.c.b16 %v734, %v733
      %v739 = vsel %vm234, %v723, 0
      %v742 = vsel %vm234, %v724, 0
      %v745 = vsel %vm234, %v725, 0
      %v748 = vsel %vm234, %v726, 0
      %v751 = vsel %vm247, %v736, 0
      %753 = vmatprep.subr.bf16.mxu0 0
      %754 = vmatpush1.bf16.msra.mxu0 %v735
      %755 = vmatprep.subr.bf16.mxu0 0
      %756 = vmatpush1.bf16.msra.mxu0 %v751
      %757 = vmatprep.subr.bf16.mxu0 0
      %758 = vmatpush1.bf16.msra.mxu0 0
      %759 = vmatprep.subr.bf16.mxu0 0
      %760 = vmatpush1.bf16.msra.mxu0 0
      %761 = vmatprep.subr.bf16.mxu0 0
      %762 = vmatpush1.bf16.msra.mxu0 0
      %763 = vmatprep.subr.bf16.mxu0 0
      %764 = vmatpush1.bf16.msra.mxu0 0
      %765 = vmatprep.subr.bf16.mxu0 0
      %766 = vmatpush1.bf16.msra.mxu0 0
      %767 = vmatprep.subr.bf16.mxu0 0
      %768 = vmatpush1.bf16.msra.mxu0 0
      %769 = vmatprep.subr.bf16.mxu0 0
      %770 = vmatpush1.bf16.msra.mxu0 0
      %771 = vmatprep.subr.bf16.mxu0 0
      %772 = vmatpush1.bf16.msra.mxu0 0
      %773 = vmatprep.subr.bf16.mxu0 0
      %774 = vmatpush1.bf16.msra.mxu0 0
      %775 = vmatprep.subr.bf16.mxu0 0
      %776 = vmatpush1.bf16.msra.mxu0 0
      %777 = vmatprep.subr.bf16.mxu0 0
      %778 = vmatpush1.bf16.msra.mxu0 0
      %779 = vmatprep.subr.bf16.mxu0 0
      %780 = vmatpush1.bf16.msra.mxu0 0
      %781 = vmatprep.subr.bf16.mxu0 0
      %782 = vmatpush1.bf16.msra.mxu0 0
      %783 = vmatprep.subr.bf16.mxu0 0
      %784 = vmatpush1.bf16.msra.mxu0 0
      %785 = vmatprep.mubr.bf16.mxu0 0
      %786 = vmatmul.mubr.bf16.gmra.mrb[0].mxu0 %v739
      %v787 = vpop.f32.mrb[0].mxu0
      %v788 = vadd.f32 0.0, %v787
      %v789 = vpop.f32.mrb[0].mxu0
      %v790 = vpop.f32.mrb[0].mxu0
      %v791 = vadd.f32 0.0, %v790
      %v792 = vpop.f32.mrb[0].mxu0
      %793 = vmatprep.mubr.bf16.mxu0 0
      %794 = vmatmul.mubr.bf16.gmra.mrb[0].mxu0 %v742
      %v795 = vpop.f32.mrb[0].mxu0
      %v796 = vadd.f32 0.0, %v795
      %v797 = vpop.f32.mrb[0].mxu0
      %v798 = vpop.f32.mrb[0].mxu0
      %v799 = vadd.f32 0.0, %v798
      %v800 = vpop.f32.mrb[0].mxu0
      %801 = vmatprep.mubr.bf16.mxu0 0
      %802 = vmatmul.mubr.bf16.gmra.mrb[0].mxu0 %v745
      %v803 = vpop.f32.mrb[0].mxu0
      %v804 = vadd.f32 0.0, %v803
      %v805 = vpop.f32.mrb[0].mxu0
      %v806 = vpop.f32.mrb[0].mxu0
      %v807 = vadd.f32 0.0, %v806
      %v808 = vpop.f32.mrb[0].mxu0
      %809 = vmatprep.mubr.bf16.mxu0 0
      %810 = vmatmul.mubr.bf16.gmra.mrb[0].mxu0 %v748
      %v811 = vpop.f32.mrb[0].mxu0
      %v812 = vadd.f32 0.0, %v811
      %v813 = vpop.f32.mrb[0].mxu0
      %v814 = vpop.f32.mrb[0].mxu0
      %v815 = vadd.f32 0.0, %v814
      %v816 = vpop.f32.mrb[0].mxu0
      %817 = vdwg.mxu0
      %v818 = vadd.f32 %v685, %v788
      %v819 = vadd.f32 %v686, %v791
      %v820 = vadd.f32 %v687, %v796
      %v821 = vadd.f32 %v688, %v799
      %v822 = vadd.f32 %v689, %v804
      %v823 = vadd.f32 %v690, %v807
      %v824 = vadd.f32 %v691, %v812
      %v825 = vadd.f32 %v692, %v815
      %s826 = scalar_lea.vmem %s169, 52
      %v827 = vld [vmem:[%s826] sm:$0xf]
      %v828 = vld [vmem:[%s826 + $0x4] sm:$0xf]
      %v829 = vld [vmem:[%s826 + $0x8] sm:$0xf]
      %v830 = vld [vmem:[%s826 + $0xc] sm:$0xf]
      %v831 = vld [vmem:[%s826 + $0x10] sm:$0xf]
      %v832 = vld [vmem:[%s826 + $0x14] sm:$0xf]
      %v833 = vld [vmem:[%s826 + $0x18] sm:$0xf]
      %v834 = vld [vmem:[%s826 + $0x1c] sm:$0xf]
      %s835 = scalar_lea.vmem %s1, 80
      %v836 = vld [vmem:[%s835] sm:$0xf]
      %v837 = vld [vmem:[%s835 + $0x4] sm:$0xf]
      %v838 = vld [vmem:[%s835 + $0x8] sm:$0xf]
      %v839 = vld [vmem:[%s835 + $0xc] sm:$0x3]
      %v848 = vunpack.c.l.b16 %v827
      %v849 = vunpack.c.l.b16 %v828
      %v850 = vunpack.c.l.b16 %v829
      %v851 = vunpack.c.l.b16 %v830
      %v852 = vunpack.c.l.b16 %v831
      %v853 = vunpack.c.l.b16 %v832
      %v854 = vunpack.c.l.b16 %v833
      %v855 = vunpack.c.l.b16 %v834
      %v856 = vpack.c.b16 %v849, %v848
      %v857 = vpack.c.b16 %v851, %v850
      %v858 = vpack.c.b16 %v853, %v852
      %v859 = vpack.c.b16 %v855, %v854
      %v864 = vunpack.c.l.b16 %v836
      %v865 = vunpack.c.l.b16 %v837
      %v866 = vunpack.c.l.b16 %v838
      %v867 = vunpack.c.l.b16 %v839
      %v868 = vpack.c.b16 %v865, %v864
      %v869 = vpack.c.b16 %v867, %v866
      %v872 = vsel %vm234, %v856, 0
      %v875 = vsel %vm234, %v857, 0
      %v878 = vsel %vm234, %v858, 0
      %v881 = vsel %vm234, %v859, 0
      %v884 = vsel %vm247, %v869, 0
      %886 = vmatprep.subr.bf16.mxu0 0
      %887 = vmatpush1.bf16.msra.mxu0 %v868
      %888 = vmatprep.subr.bf16.mxu0 0
      %889 = vmatpush1.bf16.msra.mxu0 %v884
      %890 = vmatprep.subr.bf16.mxu0 0
      %891 = vmatpush1.bf16.msra.mxu0 0
      %892 = vmatprep.subr.bf16.mxu0 0
      %893 = vmatpush1.bf16.msra.mxu0 0
      %894 = vmatprep.subr.bf16.mxu0 0
      %895 = vmatpush1.bf16.msra.mxu0 0
      %896 = vmatprep.subr.bf16.mxu0 0
      %897 = vmatpush1.bf16.msra.mxu0 0
      %898 = vmatprep.subr.bf16.mxu0 0
      %899 = vmatpush1.bf16.msra.mxu0 0
      %900 = vmatprep.subr.bf16.mxu0 0
      %901 = vmatpush1.bf16.msra.mxu0 0
      %902 = vmatprep.subr.bf16.mxu0 0
      %903 = vmatpush1.bf16.msra.mxu0 0
      %904 = vmatprep.subr.bf16.mxu0 0
      %905 = vmatpush1.bf16.msra.mxu0 0
      %906 = vmatprep.subr.bf16.mxu0 0
      %907 = vmatpush1.bf16.msra.mxu0 0
      %908 = vmatprep.subr.bf16.mxu0 0
      %909 = vmatpush1.bf16.msra.mxu0 0
      %910 = vmatprep.subr.bf16.mxu0 0
      %911 = vmatpush1.bf16.msra.mxu0 0
      %912 = vmatprep.subr.bf16.mxu0 0
      %913 = vmatpush1.bf16.msra.mxu0 0
      %914 = vmatprep.subr.bf16.mxu0 0
      %915 = vmatpush1.bf16.msra.mxu0 0
      %916 = vmatprep.subr.bf16.mxu0 0
      %917 = vmatpush1.bf16.msra.mxu0 0
      %918 = vmatprep.mubr.bf16.mxu0 0
      %919 = vmatmul.mubr.bf16.gmra.mrb[0].mxu0 %v872
      %v920 = vpop.f32.mrb[0].mxu0
      %v921 = vadd.f32 0.0, %v920
      %v922 = vpop.f32.mrb[0].mxu0
      %v923 = vpop.f32.mrb[0].mxu0
      %v924 = vadd.f32 0.0, %v923
      %v925 = vpop.f32.mrb[0].mxu0
      %926 = vmatprep.mubr.bf16.mxu0 0
      %927 = vmatmul.mubr.bf16.gmra.mrb[0].mxu0 %v875
      %v928 = vpop.f32.mrb[0].mxu0
      %v929 = vadd.f32 0.0, %v928
      %v930 = vpop.f32.mrb[0].mxu0
      %v931 = vpop.f32.mrb[0].mxu0
      %v932 = vadd.f32 0.0, %v931
      %v933 = vpop.f32.mrb[0].mxu0
      %934 = vmatprep.mubr.bf16.mxu0 0
      %935 = vmatmul.mubr.bf16.gmra.mrb[0].mxu0 %v878
      %v936 = vpop.f32.mrb[0].mxu0
      %v937 = vadd.f32 0.0, %v936
      %v938 = vpop.f32.mrb[0].mxu0
      %v939 = vpop.f32.mrb[0].mxu0
      %v940 = vadd.f32 0.0, %v939
      %v941 = vpop.f32.mrb[0].mxu0
      %942 = vmatprep.mubr.bf16.mxu0 0
      %943 = vmatmul.mubr.bf16.gmra.mrb[0].mxu0 %v881
      %v944 = vpop.f32.mrb[0].mxu0
      %v945 = vadd.f32 0.0, %v944
      %v946 = vpop.f32.mrb[0].mxu0
      %v947 = vpop.f32.mrb[0].mxu0
      %v948 = vadd.f32 0.0, %v947
      %v949 = vpop.f32.mrb[0].mxu0
      %950 = vdwg.mxu0
      %v951 = vadd.f32 %v818, %v921
      %v952 = vadd.f32 %v819, %v924
      %v953 = vadd.f32 %v820, %v929
      %v954 = vadd.f32 %v821, %v932
      %v955 = vadd.f32 %v822, %v937
      %v956 = vadd.f32 %v823, %v940
      %v957 = vadd.f32 %v824, %v945
      %v958 = vadd.f32 %v825, %v948
      %s959 = scalar_lea.vmem %s169, 12
      %v960 = vld [vmem:[%s959] sm:$0xf]
      %v961 = vld [vmem:[%s959 + $0x4] sm:$0xf]
      %v962 = vld [vmem:[%s959 + $0x8] sm:$0xf]
      %v963 = vld [vmem:[%s959 + $0xc] sm:$0xf]
      %v964 = vld [vmem:[%s959 + $0x10] sm:$0xf]
      %v965 = vld [vmem:[%s959 + $0x14] sm:$0xf]
      %v966 = vld [vmem:[%s959 + $0x18] sm:$0xf]
      %v967 = vld [vmem:[%s959 + $0x1c] sm:$0xf]
      %s968 = scalar_lea.vmem %s1, 96
      %v969 = vld [vmem:[%s968] sm:$0xf]
      %v970 = vld [vmem:[%s968 + $0x4] sm:$0xf]
      %v971 = vld [vmem:[%s968 + $0x8] sm:$0xf]
      %v972 = vld [vmem:[%s968 + $0xc] sm:$0x3]
      %v981 = vunpack.c.l.b16 %v960
      %v982 = vunpack.c.l.b16 %v961
      %v983 = vunpack.c.l.b16 %v962
      %v984 = vunpack.c.l.b16 %v963
      %v985 = vunpack.c.l.b16 %v964
      %v986 = vunpack.c.l.b16 %v965
      %v987 = vunpack.c.l.b16 %v966
      %v988 = vunpack.c.l.b16 %v967
      %v989 = vpack.c.b16 %v982, %v981
      %v990 = vpack.c.b16 %v984, %v983
      %v991 = vpack.c.b16 %v986, %v985
      %v992 = vpack.c.b16 %v988, %v987
      %v997 = vunpack.c.l.b16 %v969
      %v998 = vunpack.c.l.b16 %v970
      %v999 = vunpack.c.l.b16 %v971
      %v1000 = vunpack.c.l.b16 %v972
      %v1001 = vpack.c.b16 %v998, %v997
      %v1002 = vpack.c.b16 %v1000, %v999
      %v1005 = vsel %vm234, %v989, 0
      %v1008 = vsel %vm234, %v990, 0
      %v1011 = vsel %vm234, %v991, 0
      %v1014 = vsel %vm234, %v992, 0
      %v1017 = vsel %vm247, %v1002, 0
      %1019 = vmatprep.subr.bf16.mxu0 0
      %1020 = vmatpush1.bf16.msra.mxu0 %v1001
      %1021 = vmatprep.subr.bf16.mxu0 0
      %1022 = vmatpush1.bf16.msra.mxu0 %v1017
      %1023 = vmatprep.subr.bf16.mxu0 0
      %1024 = vmatpush1.bf16.msra.mxu0 0
      %1025 = vmatprep.subr.bf16.mxu0 0
      %1026 = vmatpush1.bf16.msra.mxu0 0
      %1027 = vmatprep.subr.bf16.mxu0 0
      %1028 = vmatpush1.bf16.msra.mxu0 0
      %1029 = vmatprep.subr.bf16.mxu0 0
      %1030 = vmatpush1.bf16.msra.mxu0 0
      %1031 = vmatprep.subr.bf16.mxu0 0
      %1032 = vmatpush1.bf16.msra.mxu0 0
      %1033 = vmatprep.subr.bf16.mxu0 0
      %1034 = vmatpush1.bf16.msra.mxu0 0
      %1035 = vmatprep.subr.bf16.mxu0 0
      %1036 = vmatpush1.bf16.msra.mxu0 0
      %1037 = vmatprep.subr.bf16.mxu0 0
      %1038 = vmatpush1.bf16.msra.mxu0 0
      %1039 = vmatprep.subr.bf16.mxu0 0
      %1040 = vmatpush1.bf16.msra.mxu0 0
      %1041 = vmatprep.subr.bf16.mxu0 0
      %1042 = vmatpush1.bf16.msra.mxu0 0
      %1043 = vmatprep.subr.bf16.mxu0 0
      %1044 = vmatpush1.bf16.msra.mxu0 0
      %1045 = vmatprep.subr.bf16.mxu0 0
      %1046 = vmatpush1.bf16.msra.mxu0 0
      %1047 = vmatprep.subr.bf16.mxu0 0
      %1048 = vmatpush1.bf16.msra.mxu0 0
      %1049 = vmatprep.subr.bf16.mxu0 0
      %1050 = vmatpush1.bf16.msra.mxu0 0
      %1051 = vmatprep.mubr.bf16.mxu0 0
      %1052 = vmatmul.mubr.bf16.gmra.mrb[0].mxu0 %v1005
      %v1053 = vpop.f32.mrb[0].mxu0
      %v1054 = vadd.f32 0.0, %v1053
      %v1055 = vpop.f32.mrb[0].mxu0
      %v1056 = vpop.f32.mrb[0].mxu0
      %v1057 = vadd.f32 0.0, %v1056
      %v1058 = vpop.f32.mrb[0].mxu0
      %1059 = vmatprep.mubr.bf16.mxu0 0
      %1060 = vmatmul.mubr.bf16.gmra.mrb[0].mxu0 %v1008
      %v1061 = vpop.f32.mrb[0].mxu0
      %v1062 = vadd.f32 0.0, %v1061
      %v1063 = vpop.f32.mrb[0].mxu0
      %v1064 = vpop.f32.mrb[0].mxu0
      %v1065 = vadd.f32 0.0, %v1064
      %v1066 = vpop.f32.mrb[0].mxu0
      %1067 = vmatprep.mubr.bf16.mxu0 0
      %1068 = vmatmul.mubr.bf16.gmra.mrb[0].mxu0 %v1011
      %v1069 = vpop.f32.mrb[0].mxu0
      %v1070 = vadd.f32 0.0, %v1069
      %v1071 = vpop.f32.mrb[0].mxu0
      %v1072 = vpop.f32.mrb[0].mxu0
      %v1073 = vadd.f32 0.0, %v1072
      %v1074 = vpop.f32.mrb[0].mxu0
      %1075 = vmatprep.mubr.bf16.mxu0 0
      %1076 = vmatmul.mubr.bf16.gmra.mrb[0].mxu0 %v1014
      %v1077 = vpop.f32.mrb[0].mxu0
      %v1078 = vadd.f32 0.0, %v1077
      %v1079 = vpop.f32.mrb[0].mxu0
      %v1080 = vpop.f32.mrb[0].mxu0
      %v1081 = vadd.f32 0.0, %v1080
      %v1082 = vpop.f32.mrb[0].mxu0
      %1083 = vdwg.mxu0
      %v1084 = vadd.f32 %v951, %v1054
      %v1085 = vadd.f32 %v952, %v1057
      %v1086 = vadd.f32 %v953, %v1062
      %v1087 = vadd.f32 %v954, %v1065
      %v1088 = vadd.f32 %v955, %v1070
      %v1089 = vadd.f32 %v956, %v1073
      %v1090 = vadd.f32 %v957, %v1078
      %v1091 = vadd.f32 %v958, %v1081
      %v1092 = vld [vmem:[%s2] sm:$0x1]
      %v1094 = vlaneseq
      %v1095 = vshrl.u32 %v1094, 7
      %v1096 = vsub.s32 0, %v1095
      %v1097 = vrot.slane %v1092, %v1096
      %v1099 = vadd.f32 %v1084, %v1097
      %v1100 = vadd.f32 %v1085, %v1097
      %v1101 = vadd.f32 %v1086, %v1097
      %v1102 = vadd.f32 %v1087, %v1097
      %v1103 = vadd.f32 %v1088, %v1097
      %v1104 = vadd.f32 %v1089, %v1097
      %v1105 = vadd.f32 %v1090, %v1097
      %v1106 = vadd.f32 %v1091, %v1097
      %v1107 = vmax.f32 %v1099, 0.0
      %v1108 = vmax.f32 %v1100, 0.0
      %v1109 = vmax.f32 %v1101, 0.0
      %v1110 = vmax.f32 %v1102, 0.0
      %v1111 = vmax.f32 %v1103, 0.0
      %v1112 = vmax.f32 %v1104, 0.0
      %v1113 = vmax.f32 %v1105, 0.0
      %v1114 = vmax.f32 %v1106, 0.0
      %v1115 = vpack.c.bf16 %v1108, %v1107
      %v1116 = vpack.c.bf16 %v1110, %v1109
      %v1117 = vpack.c.bf16 %v1112, %v1111
      %v1118 = vpack.c.bf16 %v1114, %v1113
      %v1123 = vunpack.c.l.b16 %v1115
      %v1124 = vunpack.c.h.b16 %v1115
      %v1125 = vunpack.c.l.b16 %v1116
      %v1126 = vunpack.c.h.b16 %v1116
      %v1127 = vunpack.c.l.b16 %v1117
      %v1128 = vunpack.c.h.b16 %v1117
      %v1129 = vunpack.c.l.b16 %v1118
      %v1130 = vunpack.c.h.b16 %v1118
      %v1131 = vpack.c.b16 %v1123, %v1123
      %v1132 = vpack.c.b16 %v1124, %v1124
      %v1133 = vpack.c.b16 %v1125, %v1125
      %v1134 = vpack.c.b16 %v1126, %v1126
      %v1135 = vpack.c.b16 %v1127, %v1127
      %v1136 = vpack.c.b16 %v1128, %v1128
      %v1137 = vpack.c.b16 %v1129, %v1129
      %v1138 = vpack.c.b16 %v1130, %v1130
      %vm1147 = vcmask 519168
      %1148 = vst.msk [vmem:[%s175] sm:$0xf] %vm1147, %v1131
      %1149 = vst.msk [vmem:[%s175 + $0x4] sm:$0xf] %vm1147, %v1132
      %1150 = vst.msk [vmem:[%s175 + $0x8] sm:$0xf] %vm1147, %v1133
      %1151 = vst.msk [vmem:[%s175 + $0xc] sm:$0xf] %vm1147, %v1134
      %1152 = vst.msk [vmem:[%s175 + $0x10] sm:$0xf] %vm1147, %v1135
      %1153 = vst.msk [vmem:[%s175 + $0x14] sm:$0xf] %vm1147, %v1136
      %1154 = vst.msk [vmem:[%s175 + $0x18] sm:$0xf] %vm1147, %v1137
      %1155 = vst.msk [vmem:[%s175 + $0x1c] sm:$0xf] %vm1147, %v1138
      %p1156 = scmp.lt.s32.totalorder %s14, 1
      %s1157 = scalar_select %p1156, %s14, 1
      %s1158 = smul.addr %s1157, 8
      %s1159 = smul.addr %s1158, 4
      %s1160 = scalar_lea.vmem %s3, %s1159
      // Predicated region
      $region33: #{wangnet_forward.2} parent=31 // pred_check
        %p1161 = pneg %p100
      $region34: #{wangnet_forward.2} parent=31 // pred_check_branch
        %1163 = sbr.rel (%p1161) target = $region36
      $region35: #{wangnet_forward.2} parent=31 // pred_region
        _
      $region36: #{wangnet_forward.2} parent=31 // pred_fallthru
        _
    $region32: #{wangnet_forward.2} parent=5 // pred_fallthru
      _
    %p1164 = scmp.le.s32.totalorder 2, %s9
    // Predicated region
    $region37: #{wangnet_forward.2} parent=5 // pred_check
      %p1165 = pneg %p1164
    $region38: #{wangnet_forward.2} parent=5 // pred_check_branch
      %1167 = sbr.rel (%p1165) target = $region40
    $region39: #{wangnet_forward.2} parent=5 // pred_region
      %s1168 = ssub.s32 %s9, 2
      // Predicated region
      $region41: #{wangnet_forward.2} parent=39 // pred_check
        %p1169 = pneg %p106
      $region42: #{wangnet_forward.2} parent=39 // pred_check_branch
        %1171 = sbr.rel (%p1169) target = $region44
      $region43: #{wangnet_forward.2} parent=39 // pred_region
        %p1172 = scmp.lt.s32.totalorder %s15, 1
        %s1173 = scalar_select %p1172, %s15, 1
        %s1174 = smul.addr %s1173, 8
        %s1175 = smul.addr %s1174, 4
        %s1176 = scalar_lea.vmem %s3, %s1175
      $region44: #{wangnet_forward.2} parent=39 // pred_fallthru
        _
    $region40: #{wangnet_forward.2} parent=5 // pred_fallthru
      _
  $region6: #{wangnet_forward.2} parent=0 // loop_footer
    %s13 = sadd.s32 1, %s9
  $region7: #{wangnet_forward.2} parent=0 // loop_footer_branch
    %8 = sbr.rel target = $region3
  $region8: #{wangnet_forward.2} parent=0 // loop_exit
    _

// kernel: wangnet_forward.3
$region0: #{wangnet_forward.3}
  #allocation0 [shape = 'u32[]', space=smem, size = 0x4, offset = 0x4, fixed_abs, tag = 'smem constant byte address 0x4 - core index']
  #allocation1 [shape = 'u32[144,128]{1,0:T(1,128)}', space=vmem, size = 0x12000, scoped, tag = 'internal scratch']
  %s0 = inlined_call_operand.vmem [shape: bf16[2,4,31,64], index: 0, kind: input, shape index: {}]
  %s1 = inlined_call_operand.vmem [shape: f32[1,25,1], index: 1, kind: input, shape index: {}]
  %s2 = inlined_call_operand.vmem [shape: bf16[64,320], index: 2, kind: input, shape index: {}]
  %s3 = inlined_call_operand.vmem [shape: f32[1,320], index: 3, kind: input, shape index: {}]
  %s4 = inlined_call_operand.vmem [shape: bf16[64,256], index: 4, kind: input, shape index: {}]
  %s5 = inlined_call_operand.vmem [shape: f32[1,256], index: 5, kind: input, shape index: {}]
  %s6 = inlined_call_operand.vmem [shape: f32[256,96], index: 6, kind: input, shape index: {}]
  %s7 = inlined_call_operand.vmem [shape: f32[1,96], index: 7, kind: input, shape index: {}]
  %s8 = inlined_call_operand.vmem [shape: f32[96,128], index: 8, kind: input, shape index: {}]
  %s9 = inlined_call_operand.vmem [shape: f32[1,128], index: 9, kind: input, shape index: {}]
  %s10 = inlined_call_operand.vmem [shape: f32[2,1,128], index: 10, kind: output, shape index: {}]
  %s11 = sld [smem:[#allocation0]]
  $region73: #{wangnet_forward.3} parent=0
    _
  %s13 = ssub.s32 1, %s11
  %s14 = scalar_select 0, %s13, %s11
  loop: start=0, step=1, limit=4
  $region2: #{wangnet_forward.3} parent=0 // loop_pre_header
    _
  $region3: #{wangnet_forward.3} parent=0 // loop_header
    %s16 = sphi 0, %s20
    %p17 = scmp.ge.s32.totalorder %s16, 4
    %s26 = sphi 0, %s28
    %s29 = sphi 0, %s26
    %s30 = sphi 0, %s29
    %s46 = sphi 0, %s30
    %s50 = sphi 0, %s50
    %s52 = sphi 0, %s50
    %s53 = sphi 0, %s52
    %s67 = sphi 0, %s53
    %s71 = sphi 0, %s71
    %s73 = sphi 0, %s71
    %s74 = sphi 0, %s73
    %s88 = sphi 0, %s74
    %s92 = sphi 0, %s92
    %s94 = sphi 0, %s92
    %s95 = sphi 0, %s94
    %s109 = sphi 0, %s95
    %s113 = sphi 0, %s113
    %s115 = sphi 0, %s113
    %s116 = sphi 0, %s115
    %s130 = sphi 0, %s116
    %s134 = sphi 0, %s134
    %s136 = sphi 0, %s134
    %s137 = sphi 0, %s136
    %s151 = sphi 0, %s137
    %s155 = sphi 0, %s155
    %s157 = sphi 0, %s155
    %s158 = sphi 0, %s157
    %s172 = sphi 0, %s158
    %s176 = sphi 0, %s176
    %s178 = sphi 0, %s176
    %s179 = sphi 0, %s178
    %s193 = sphi 0, %s179
    %s197 = sphi 0, %s197
    %s199 = sphi 0, %s197
    %s200 = sphi 0, %s199
    %s214 = sphi 0, %s200
    %s218 = sphi 0, %s218
    %s220 = sphi 0, %s218
    %s221 = sphi 0, %s220
    %s235 = sphi 0, %s221
    %s241 = sphi 0, %s243
    %s244 = sphi 0, %s241
    %s245 = sphi 0, %s244
    %s261 = sphi 0, %s245
  $region4: #{wangnet_forward.3} parent=0 // loop_header_branch
    %19 = sbr.rel (%p17) target = $region8
  $region5: #{wangnet_forward.3} parent=0 // loop_body
    %s21 = ssub.s32 %s16, 1
    %s22 = ssub.s32 %s16, 2
    %s23 = sadd.s32 %s16, 1
    %s24 = ssub.s32 %s16, %s23
    %p25 = scmp.eq.s32.totalorder %s24, 0
    %s27 = sadd.s32 %s26, 1
    %s28 = scalar_select %p25, %s26, %s27
    %p31 = pneg %p25
    %p32 = scmp.eq.s32.totalorder %s16, 1
    %p33 = por %p31, %p32
    %p34 = scmp.ne.s32.totalorder %s26, %s29
    %p35 = scmp.eq.s32.totalorder %s16, 0
    %p36 = por %p34, %p35
    %p37 = scmp.ne.s32.totalorder %s26, %s29
    %p38 = scmp.eq.s32.totalorder %s21, 1
    %p39 = por %p37, %p38
    %p40 = scmp.ne.s32.totalorder %s29, %s30
    %p41 = scmp.eq.s32.totalorder %s21, 0
    %p42 = por %p40, %p41
    %p43 = scmp.ne.s32.totalorder %s29, %s30
    %p44 = scmp.eq.s32.totalorder %s22, 1
    %p45 = por %p43, %p44
    %p47 = scmp.ne.s32.totalorder %s30, %s46
    %p48 = scmp.eq.s32.totalorder %s22, 0
    %p49 = por %p47, %p48
    %s51 = sadd.s32 %s50, 1
    %p54 = scmp.eq.s32.totalorder %s16, 1
    %p55 = scmp.ne.s32.totalorder %s50, %s52
    %p56 = scmp.eq.s32.totalorder %s16, 0
    %p57 = por %p55, %p56
    %p58 = scmp.ne.s32.totalorder %s50, %s52
    %p59 = scmp.eq.s32.totalorder %s21, 1
    %p60 = por %p58, %p59
    %p61 = scmp.ne.s32.totalorder %s52, %s53
    %p62 = scmp.eq.s32.totalorder %s21, 0
    %p63 = por %p61, %p62
    %p64 = scmp.ne.s32.totalorder %s52, %s53
    %p65 = scmp.eq.s32.totalorder %s22, 1
    %p66 = por %p64, %p65
    %p68 = scmp.ne.s32.totalorder %s53, %s67
    %p69 = scmp.eq.s32.totalorder %s22, 0
    %p70 = por %p68, %p69
    %s72 = sadd.s32 %s71, 1
    %p75 = scmp.eq.s32.totalorder %s16, 1
    %p76 = scmp.ne.s32.totalorder %s71, %s73
    %p77 = scmp.eq.s32.totalorder %s16, 0
    %p78 = por %p76, %p77
    %p79 = scmp.ne.s32.totalorder %s71, %s73
    %p80 = scmp.eq.s32.totalorder %s21, 1
    %p81 = por %p79, %p80
    %p82 = scmp.ne.s32.totalorder %s73, %s74
    %p83 = scmp.eq.s32.totalorder %s21, 0
    %p84 = por %p82, %p83
    %p85 = scmp.ne.s32.totalorder %s73, %s74
    %p86 = scmp.eq.s32.totalorder %s22, 1
    %p87 = por %p85, %p86
    %p89 = scmp.ne.s32.totalorder %s74, %s88
    %p90 = scmp.eq.s32.totalorder %s22, 0
    %p91 = por %p89, %p90
    %s93 = sadd.s32 %s92, 1
    %p96 = scmp.eq.s32.totalorder %s16, 1
    %p97 = scmp.ne.s32.totalorder %s92, %s94
    %p98 = scmp.eq.s32.totalorder %s16, 0
    %p99 = por %p97, %p98
    %p100 = scmp.ne.s32.totalorder %s92, %s94
    %p101 = scmp.eq.s32.totalorder %s21, 1
    %p102 = por %p100, %p101
    %p103 = scmp.ne.s32.totalorder %s94, %s95
    %p104 = scmp.eq.s32.totalorder %s21, 0
    %p105 = por %p103, %p104
    %p106 = scmp.ne.s32.totalorder %s94, %s95
    %p107 = scmp.eq.s32.totalorder %s22, 1
    %p108 = por %p106, %p107
    %p110 = scmp.ne.s32.totalorder %s95, %s109
    %p111 = scmp.eq.s32.totalorder %s22, 0
    %p112 = por %p110, %p111
    %s114 = sadd.s32 %s113, 1
    %p117 = scmp.eq.s32.totalorder %s16, 1
    %p118 = scmp.ne.s32.totalorder %s113, %s115
    %p119 = scmp.eq.s32.totalorder %s16, 0
    %p120 = por %p118, %p119
    %p121 = scmp.ne.s32.totalorder %s113, %s115
    %p122 = scmp.eq.s32.totalorder %s21, 1
    %p123 = por %p121, %p122
    %p124 = scmp.ne.s32.totalorder %s115, %s116
    %p125 = scmp.eq.s32.totalorder %s21, 0
    %p126 = por %p124, %p125
    %p127 = scmp.ne.s32.totalorder %s115, %s116
    %p128 = scmp.eq.s32.totalorder %s22, 1
    %p129 = por %p127, %p128
    %p131 = scmp.ne.s32.totalorder %s116, %s130
    %p132 = scmp.eq.s32.totalorder %s22, 0
    %p133 = por %p131, %p132
    %s135 = sadd.s32 %s134, 1
    %p138 = scmp.eq.s32.totalorder %s16, 1
    %p139 = scmp.ne.s32.totalorder %s134, %s136
    %p140 = scmp.eq.s32.totalorder %s16, 0
    %p141 = por %p139, %p140
    %p142 = scmp.ne.s32.totalorder %s134, %s136
    %p143 = scmp.eq.s32.totalorder %s21, 1
    %p144 = por %p142, %p143
    %p145 = scmp.ne.s32.totalorder %s136, %s137
    %p146 = scmp.eq.s32.totalorder %s21, 0
    %p147 = por %p145, %p146
    %p148 = scmp.ne.s32.totalorder %s136, %s137
    %p149 = scmp.eq.s32.totalorder %s22, 1
    %p150 = por %p148, %p149
    %p152 = scmp.ne.s32.totalorder %s137, %s151
    %p153 = scmp.eq.s32.totalorder %s22, 0
    %p154 = por %p152, %p153
    %s156 = sadd.s32 %s155, 1
    %p159 = scmp.eq.s32.totalorder %s16, 1
    %p160 = scmp.ne.s32.totalorder %s155, %s157
    %p161 = scmp.eq.s32.totalorder %s16, 0
    %p162 = por %p160, %p161
    %p163 = scmp.ne.s32.totalorder %s155, %s157
    %p164 = scmp.eq.s32.totalorder %s21, 1
    %p165 = por %p163, %p164
    %p166 = scmp.ne.s32.totalorder %s157, %s158
    %p167 = scmp.eq.s32.totalorder %s21, 0
    %p168 = por %p166, %p167
    %p169 = scmp.ne.s32.totalorder %s157, %s158
    %p170 = scmp.eq.s32.totalorder %s22, 1
    %p171 = por %p169, %p170
    %p173 = scmp.ne.s32.totalorder %s158, %s172
    %p174 = scmp.eq.s32.totalorder %s22, 0
    %p175 = por %p173, %p174
    %s177 = sadd.s32 %s176, 1
    %p180 = scmp.eq.s32.totalorder %s16, 1
    %p181 = scmp.ne.s32.totalorder %s176, %s178
    %p182 = scmp.eq.s32.totalorder %s16, 0
    %p183 = por %p181, %p182
    %p184 = scmp.ne.s32.totalorder %s176, %s178
    %p185 = scmp.eq.s32.totalorder %s21, 1
    %p186 = por %p184, %p185
    %p187 = scmp.ne.s32.totalorder %s178, %s179
    %p188 = scmp.eq.s32.totalorder %s21, 0
    %p189 = por %p187, %p188
    %p190 = scmp.ne.s32.totalorder %s178, %s179
    %p191 = scmp.eq.s32.totalorder %s22, 1
    %p192 = por %p190, %p191
    %p194 = scmp.ne.s32.totalorder %s179, %s193
    %p195 = scmp.eq.s32.totalorder %s22, 0
    %p196 = por %p194, %p195
    %s198 = sadd.s32 %s197, 1
    %p201 = scmp.eq.s32.totalorder %s16, 1
    %p202 = scmp.ne.s32.totalorder %s197, %s199
    %p203 = scmp.eq.s32.totalorder %s16, 0
    %p204 = por %p202, %p203
    %p205 = scmp.ne.s32.totalorder %s197, %s199
    %p206 = scmp.eq.s32.totalorder %s21, 1
    %p207 = por %p205, %p206
    %p208 = scmp.ne.s32.totalorder %s199, %s200
    %p209 = scmp.eq.s32.totalorder %s21, 0
    %p210 = por %p208, %p209
    %p211 = scmp.ne.s32.totalorder %s199, %s200
    %p212 = scmp.eq.s32.totalorder %s22, 1
    %p213 = por %p211, %p212
    %p215 = scmp.ne.s32.totalorder %s200, %s214
    %p216 = scmp.eq.s32.totalorder %s22, 0
    %p217 = por %p215, %p216
    %s219 = sadd.s32 %s218, 1
    %p222 = scmp.eq.s32.totalorder %s16, 1
    %p223 = scmp.ne.s32.totalorder %s218, %s220
    %p224 = scmp.eq.s32.totalorder %s16, 0
    %p225 = por %p223, %p224
    %p226 = scmp.ne.s32.totalorder %s218, %s220
    %p227 = scmp.eq.s32.totalorder %s21, 1
    %p228 = por %p226, %p227
    %p229 = scmp.ne.s32.totalorder %s220, %s221
    %p230 = scmp.eq.s32.totalorder %s21, 0
    %p231 = por %p229, %p230
    %p232 = scmp.ne.s32.totalorder %s220, %s221
    %p233 = scmp.eq.s32.totalorder %s22, 1
    %p234 = por %p232, %p233
    %p236 = scmp.ne.s32.totalorder %s221, %s235
    %p237 = scmp.eq.s32.totalorder %s22, 0
    %p238 = por %p236, %p237
    %s239 = ssub.s32 %s16, %s23
    %p240 = scmp.eq.s32.totalorder %s239, 0
    %s242 = sadd.s32 %s241, 1
    %s243 = scalar_select %p240, %s241, %s242
    %p246 = pneg %p240
    %p247 = scmp.eq.s32.totalorder %s16, 1
    %p248 = por %p246, %p247
    %p249 = scmp.ne.s32.totalorder %s241, %s244
    %p250 = scmp.eq.s32.totalorder %s16, 0
    %p251 = por %p249, %p250
    %p252 = scmp.ne.s32.totalorder %s241, %s244
    %p253 = scmp.eq.s32.totalorder %s21, 1
    %p254 = por %p252, %p253
    %p255 = scmp.ne.s32.totalorder %s244, %s245
    %p256 = scmp.eq.s32.totalorder %s21, 0
    %p257 = por %p255, %p256
    %p258 = scmp.ne.s32.totalorder %s244, %s245
    %p259 = scmp.eq.s32.totalorder %s22, 1
    %p260 = por %p258, %p259
    %p262 = scmp.ne.s32.totalorder %s245, %s261
    %p263 = scmp.eq.s32.totalorder %s22, 0
    %p264 = por %p262, %p263
    %p265 = scmp.le.s32.totalorder 1, %s16
    %p266 = scmp.lt.s32.totalorder %s16, 3
    %p267 = pnand %p265, %p266
    %p268 = pneg %p267
    // Predicated region
    $region9: #{wangnet_forward.3} parent=5 // pred_check
      _
    $region10: #{wangnet_forward.3} parent=5 // pred_check_branch
      %270 = sbr.rel (%p267) target = $region12
    $region11: #{wangnet_forward.3} parent=5 // pred_region
      %s271 = ssub.s32 %s16, 1
      // Predicated region
      $region13: #{wangnet_forward.3} parent=11 // pred_check
        %p272 = pneg %p63
      $region14: #{wangnet_forward.3} parent=11 // pred_check_branch
        %274 = sbr.rel (%p272) target = $region16
      $region15: #{wangnet_forward.3} parent=11 // pred_region
        _
      $region16: #{wangnet_forward.3} parent=11 // pred_fallthru
        _
      // Predicated region
      $region17: #{wangnet_forward.3} parent=11 // pred_check
        %p275 = pneg %p84
      $region18: #{wangnet_forward.3} parent=11 // pred_check_branch
        %277 = sbr.rel (%p275) target = $region20
      $region19: #{wangnet_forward.3} parent=11 // pred_region
        _
      $region20: #{wangnet_forward.3} parent=11 // pred_fallthru
        _
      // Predicated region
      $region21: #{wangnet_forward.3} parent=11 // pred_check
        %p278 = pneg %p105
      $region22: #{wangnet_forward.3} parent=11 // pred_check_branch
        %280 = sbr.rel (%p278) target = $region24
      $region23: #{wangnet_forward.3} parent=11 // pred_region
        _
      $region24: #{wangnet_forward.3} parent=11 // pred_fallthru
        _
      // Predicated region
      $region25: #{wangnet_forward.3} parent=11 // pred_check
        %p281 = pneg %p126
      $region26: #{wangnet_forward.3} parent=11 // pred_check_branch
        %283 = sbr.rel (%p281) target = $region28
      $region27: #{wangnet_forward.3} parent=11 // pred_region
        _
      $region28: #{wangnet_forward.3} parent=11 // pred_fallthru
        _
      // Predicated region
      $region29: #{wangnet_forward.3} parent=11 // pred_check
        %p284 = pneg %p147
      $region30: #{wangnet_forward.3} parent=11 // pred_check_branch
        %286 = sbr.rel (%p284) target = $region32
      $region31: #{wangnet_forward.3} parent=11 // pred_region
        _
      $region32: #{wangnet_forward.3} parent=11 // pred_fallthru
        _
      // Predicated region
      $region33: #{wangnet_forward.3} parent=11 // pred_check
        %p287 = pneg %p168
      $region34: #{wangnet_forward.3} parent=11 // pred_check_branch
        %289 = sbr.rel (%p287) target = $region36
      $region35: #{wangnet_forward.3} parent=11 // pred_region
        _
      $region36: #{wangnet_forward.3} parent=11 // pred_fallthru
        _
      // Predicated region
      $region37: #{wangnet_forward.3} parent=11 // pred_check
        %p290 = pneg %p189
      $region38: #{wangnet_forward.3} parent=11 // pred_check_branch
        %292 = sbr.rel (%p290) target = $region40
      $region39: #{wangnet_forward.3} parent=11 // pred_region
        _
      $region40: #{wangnet_forward.3} parent=11 // pred_fallthru
        _
      // Predicated region
      $region41: #{wangnet_forward.3} parent=11 // pred_check
        %p293 = pneg %p210
      $region42: #{wangnet_forward.3} parent=11 // pred_check_branch
        %295 = sbr.rel (%p293) target = $region44
      $region43: #{wangnet_forward.3} parent=11 // pred_region
        _
      $region44: #{wangnet_forward.3} parent=11 // pred_fallthru
        _
      // Predicated region
      $region45: #{wangnet_forward.3} parent=11 // pred_check
        %p296 = pneg %p231
      $region46: #{wangnet_forward.3} parent=11 // pred_check_branch
        %298 = sbr.rel (%p296) target = $region48
      $region47: #{wangnet_forward.3} parent=11 // pred_region
        _
      $region48: #{wangnet_forward.3} parent=11 // pred_fallthru
        _
    $region12: #{wangnet_forward.3} parent=5 // pred_fallthru
      _
    %p299 = scmp.lt.s32.totalorder %s16, 2
    // Predicated region
    $region49: #{wangnet_forward.3} parent=5 // pred_check
      %p300 = pneg %p299
    $region50: #{wangnet_forward.3} parent=5 // pred_check_branch
      %302 = sbr.rel (%p300) target = $region52
    $region51: #{wangnet_forward.3} parent=5 // pred_region
      // Predicated region
      $region53: #{wangnet_forward.3} parent=51 // pred_check
        %p303 = pneg %p36
      $region54: #{wangnet_forward.3} parent=51 // pred_check_branch
        %305 = sbr.rel (%p303) target = $region56
      $region55: #{wangnet_forward.3} parent=51 // pred_region
        %p306 = scmp.lt.s32.totalorder %s16, 1
        %s307 = scalar_select %p306, %s16, 1
        %s308 = smul.addr %s307, 16
        %s309 = smul.addr %s308, 4
        %s310 = scalar_lea.vmem %s0, %s309
      $region56: #{wangnet_forward.3} parent=51 // pred_fallthru
        _
    $region52: #{wangnet_forward.3} parent=5 // pred_fallthru
      _
    %p311 = scmp.le.s32.totalorder 1, %s16
    %p312 = scmp.lt.s32.totalorder %s16, 3
    %p313 = pnand %p311, %p312
    %p314 = pneg %p313
    // Predicated region
    $region57: #{wangnet_forward.3} parent=5 // pred_check
      _
    $region58: #{wangnet_forward.3} parent=5 // pred_check_branch
      %316 = sbr.rel (%p313) target = $region60
    $region59: #{wangnet_forward.3} parent=5 // pred_region
      %s317 = ssub.s32 %s16, 1
      %p318 = scmp.lt.s32.totalorder %s21, 1
      %s319 = scalar_select %p318, %s21, 1
      %s320 = smul.addr %s319, 16
      %s321 = smul.addr %s320, 4
      %s322 = scalar_lea.vmem %s0, %s321
      %p323 = pneg %p42
      %p324 = pneg %p39
      %p325 = pneg %p63
      %p326 = pneg %p60
      %p327 = pneg %p84
      %p328 = pneg %p81
      %p329 = pneg %p105
      %p330 = pneg %p102
      %p331 = pneg %p126
      %p332 = pneg %p123
      %p333 = pneg %p147
      %p334 = pneg %p144
      %p335 = pneg %p168
      %p336 = pneg %p165
      %p337 = pneg %p189
      %p338 = pneg %p186
      %p339 = pneg %p210
      %p340 = pneg %p207
      %p341 = pneg %p231
      %p342 = pneg %p228
      %p343 = pneg %p257
      %p344 = pneg %p254
      %p345 = scmp.lt.s32.totalorder %s21, 1
      %s346 = scalar_select %p345, %s21, 1
      %s347 = scalar_lea.vmem %s10, %s346
      %p348 = scmp.lt.s32.totalorder %s21, 1
      %s349 = scalar_select %p348, %s21, 1
      %s350 = smul.addr %s349, 16
      %s351 = smul.addr %s350, 4
      %s352 = scalar_lea.vmem %s0, %s351
      %p353 = scmp.lt.s32.totalorder %s21, 1
      %s354 = scalar_select %p353, %s21, 1
      %s355 = scalar_lea.vmem %s10, %s354
      %v357 = vld [vmem:[%s352] sm:$0xf]
      %v358 = vld [vmem:[%s352 + $0x4] sm:$0xf]
      %v359 = vld [vmem:[%s352 + $0x8] sm:$0xf]
      %v360 = vld [vmem:[%s352 + $0xc] sm:$0x1]
      %s361 = scalar_lea.vmem %s352, 16
      %v362 = vld [vmem:[%s361] sm:$0xf]
      %v363 = vld [vmem:[%s361 + $0x4] sm:$0xf]
      %v364 = vld [vmem:[%s361 + $0x8] sm:$0xf]
      %v365 = vld [vmem:[%s361 + $0xc] sm:$0x1]
      %v366 = vmax.bf16 %v357, %v362
      %v367 = vmax.bf16 %v358, %v363
      %v368 = vmax.bf16 %v359, %v364
      %v369 = vmax.bf16 %v360, %v365
      %vm370 = vsmask.f32 3328
      %vm371 = vsmask.f32 7440
      %vm372 = vmor %vm370, %vm371
      %v374 = vshrl.u32 %v357, 16
      %v376 = vrot.slane %v374, 4
      %v377 = vshll.u32 %v357, 16
      %v379 = vrot.slane %v377, 5
      %v380 = vor.u32 %v376, %v379
      %v381 = vrot.slane %v380, 4
      %v383 = vshll.u32 %v358, 16
      %v385 = vrot.slane %v383, 5
      %v386 = vsel %vm372, %v381, %v385
      %v387 = vshrl.u32 %v358, 16
      %v389 = vrot.slane %v387, 4
      %v390 = vor.u32 %v389, %v385
      %v391 = vrot.slane %v390, 4
      %v393 = vshll.u32 %v359, 16
      %v395 = vrot.slane %v393, 5
      %v396 = vsel %vm372, %v391, %v395
      %v397 = vshrl.u32 %v359, 16
      %v399 = vrot.slane %v397, 4
      %v400 = vor.u32 %v399, %v395
      %v401 = vrot.slane %v400, 4
      %v403 = vshll.u32 %v360, 16
      %v405 = vrot.slane %v403, 5
      %v406 = vsel %vm372, %v401, %v405
      %v407 = vshrl.u32 %v360, 16
      %v409 = vrot.slane %v407, 4
      %v410 = vrot.slane %v409, 4
      %v415 = vmax.bf16 %v366, %v386
      %v416 = vmax.bf16 %v367, %v396
      %v417 = vmax.bf16 %v368, %v406
      %v418 = vmax.bf16 %v369, %v410
      %s419 = scalar_lea.vmem %s352, 32
      %v420 = vld [vmem:[%s419] sm:$0xf]
      %v421 = vld [vmem:[%s419 + $0x4] sm:$0xf]
      %v422 = vld [vmem:[%s419 + $0x8] sm:$0xf]
      %v423 = vld [vmem:[%s419 + $0xc] sm:$0x1]
      %v424 = vmax.bf16 %v415, %v420
      %v425 = vmax.bf16 %v416, %v421
      %v426 = vmax.bf16 %v417, %v422
      %v427 = vmax.bf16 %v418, %v423
      %s428 = scalar_lea.vmem %s352, 48
      %v429 = vld [vmem:[%s428] sm:$0xf]
      %v430 = vld [vmem:[%s428 + $0x4] sm:$0xf]
      %v431 = vld [vmem:[%s428 + $0x8] sm:$0xf]
      %v432 = vld [vmem:[%s428 + $0xc] sm:$0x1]
      %v433 = vmax.bf16 %v424, %v429
      %v434 = vmax.bf16 %v425, %v430
      %v435 = vmax.bf16 %v426, %v431
      %v436 = vmax.bf16 %v427, %v432
      %v438 = vshrl.u32 %v420, 16
      %v440 = vrot.slane %v438, 4
      %v441 = vshll.u32 %v420, 16
      %v443 = vrot.slane %v441, 5
      %v444 = vor.u32 %v440, %v443
      %v445 = vrot.slane %v444, 4
      %v447 = vshll.u32 %v421, 16
      %v449 = vrot.slane %v447, 5
      %v450 = vsel %vm372, %v445, %v449
      %v451 = vshrl.u32 %v421, 16
      %v453 = vrot.slane %v451, 4
      %v454 = vor.u32 %v453, %v449
      %v455 = vrot.slane %v454, 4
      %v457 = vshll.u32 %v422, 16
      %v459 = vrot.slane %v457, 5
      %v460 = vsel %vm372, %v455, %v459
      %v461 = vshrl.u32 %v422, 16
      %v463 = vrot.slane %v461, 4
      %v464 = vor.u32 %v463, %v459
      %v465 = vrot.slane %v464, 4
      %v467 = vshll.u32 %v423, 16
      %v469 = vrot.slane %v467, 5
      %v470 = vsel %vm372, %v465, %v469
      %v471 = vshrl.u32 %v423, 16
      %v473 = vrot.slane %v471, 4
      %v474 = vrot.slane %v473, 4
      %v479 = vmax.bf16 %v433, %v450
      %v480 = vmax.bf16 %v434, %v460
      %v481 = vmax.bf16 %v435, %v470
      %v482 = vmax.bf16 %v436, %v474
      %v483 = vld [vmem:[%s352] sm:$0xc]
      %v484 = vld [vmem:[%s352 + $0xc] sm:$0x7]
      %vm485 = vsmask.f32 1280
      %vm486 = vsmask.f32 5392
      %vm487 = vmor %vm485, %vm486
      %v489 = vshrl.u32 %v483, 16
      %v491 = vrot.slane %v489, 6
      %v492 = vshll.u32 %v483, 16
      %v494 = vrot.slane %v492, 7
      %v495 = vor.u32 %v491, %v494
      %v496 = vrot.slane %v495, 4
      %v497 = vrot.slane %v387, 6
      %v498 = vrot.slane %v383, 7
      %v499 = vor.u32 %v497, %v498
      %v500 = vsel %vm487, %v496, %v499
      %v501 = vrot.slane %v499, 4
      %v502 = vrot.slane %v397, 6
      %v503 = vrot.slane %v393, 7
      %v504 = vor.u32 %v502, %v503
      %v505 = vsel %vm487, %v501, %v504
      %v506 = vrot.slane %v504, 4
      %v508 = vshrl.u32 %v484, 16
      %v510 = vrot.slane %v508, 6
      %v511 = vshll.u32 %v484, 16
      %v513 = vrot.slane %v511, 7
      %v514 = vor.u32 %v510, %v513
      %v515 = vsel %vm487, %v506, %v514
      %v516 = vrot.slane %v510, 4
      %v521 = vmax.bf16 %v479, %v500
      %v522 = vmax.bf16 %v480, %v505
      %v523 = vmax.bf16 %v481, %v515
      %v524 = vmax.bf16 %v482, %v516
      %v525 = vld [vmem:[%s361] sm:$0xc]
      %v526 = vld [vmem:[%s361 + $0xc] sm:$0x7]
      %v528 = vshrl.u32 %v525, 16
      %v530 = vrot.slane %v528, 6
      %v531 = vshll.u32 %v525, 16
      %v533 = vrot.slane %v531, 7
      %v534 = vor.u32 %v530, %v533
      %v535 = vrot.slane %v534, 4
      %v537 = vshrl.u32 %v363, 16
      %v539 = vrot.slane %v537, 6
      %v540 = vshll.u32 %v363, 16
      %v542 = vrot.slane %v540, 7
      %v543 = vor.u32 %v539, %v542
      %v544 = vsel %vm487, %v535, %v543
      %v545 = vrot.slane %v543, 4
      %v547 = vshrl.u32 %v364, 16
      %v549 = vrot.slane %v547, 6
      %v550 = vshll.u32 %v364, 16
      %v552 = vrot.slane %v550, 7
      %v553 = vor.u32 %v549, %v552
      %v554 = vsel %vm487, %v545, %v553
      %v555 = vrot.slane %v553, 4
      %v557 = vshrl.u32 %v526, 16
      %v559 = vrot.slane %v557, 6
      %v560 = vshll.u32 %v526, 16
      %v562 = vrot.slane %v560, 7
      %v563 = vor.u32 %v559, %v562
      %v564 = vsel %vm487, %v555, %v563
      %v565 = vrot.slane %v559, 4
      %v570 = vmax.bf16 %v521, %v544
      %v571 = vmax.bf16 %v522, %v554
      %v572 = vmax.bf16 %v523, %v564
      %v573 = vmax.bf16 %v524, %v565
      %v574 = vld [vmem:[%s352] sm:$0x8]
      %v575 = vld [vmem:[%s352 + $0xc] sm:$0xf]
      %vm580 = vcmask 1040384
      %vm581 = vcmask 1044484
      %vm582 = vmor %vm580, %vm581
      %v583 = vrot.slane %v574, 7
      %v584 = vrot.slane %v583, 4
      %v585 = vrot.slane %v358, 7
      %v586 = vsel %vm582, %v584, %v585
      %v587 = vrot.slane %v585, 4
      %v588 = vrot.slane %v359, 7
      %v589 = vsel %vm582, %v587, %v588
      %v590 = vrot.slane %v588, 4
      %v591 = vrot.slane %v575, 7
      %v592 = vsel %vm582, %v590, %v591
      %v593 = vrot.slane %v591, 4
      %v598 = vmax.bf16 %v570, %v586
      %v599 = vmax.bf16 %v571, %v589
      %v600 = vmax.bf16 %v572, %v592
      %v601 = vmax.bf16 %v573, %v593
      %v602 = vld [vmem:[%s2] sm:$0xff]
      %v603 = vld [vmem:[%s2 + $0x8] sm:$0xf]
      %v604 = vld [vmem:[%s2 + $0xc] sm:$0xff]
      %v605 = vld [vmem:[%s2 + $0x14] sm:$0xf]
      %v606 = vld [vmem:[%s2 + $0x18] sm:$0xff]
      %v607 = vld [vmem:[%s2 + $0x20] sm:$0xf]
      %v608 = vld [vmem:[%s2 + $0x24] sm:$0xff]
      %v609 = vld [vmem:[%s2 + $0x2c] sm:$0xf]
      %v610 = vld [vmem:[%s2 + $0x30] sm:$0xff]
      %v611 = vld [vmem:[%s2 + $0x38] sm:$0xf]
      %v612 = vld [vmem:[%s2 + $0x3c] sm:$0xff]
      %v613 = vld [vmem:[%s2 + $0x44] sm:$0xf]
      %v614 = vld [vmem:[%s2 + $0x48] sm:$0xff]
      %v615 = vld [vmem:[%s2 + $0x50] sm:$0xf]
      %v616 = vld [vmem:[%s2 + $0x54] sm:$0xff]
      %v617 = vld [vmem:[%s2 + $0x5c] sm:$0xf]
      %v618 = vld [vmem:[%s3] sm:$0x7]
      %v620 = vlaneseq
      %v621 = vshrl.u32 %v620, 7
      %v622 = vsub.s32 0, %v621
      %v623 = vrot.slane %v618, %v622
      %v624 = vlaneseq
      %v625 = vshrl.u32 %v624, 7
      %v626 = vsub.s32 1, %v625
      %v627 = vrot.slane %v618, %v626
      %v628 = vlaneseq
      %v629 = vshrl.u32 %v628, 7
      %v630 = vsub.s32 2, %v629
      %v631 = vrot.slane %v618, %v630
      %v639 = vunpack.c.l.b16 %v598
      %v640 = vunpack.c.l.b16 %v599
      %v641 = vunpack.c.l.b16 %v600
      %v642 = vunpack.c.l.b16 %v601
      %v643 = vpack.c.b16 %v640, %v639
      %v644 = vpack.c.b16 %v642, %v641
      %v661 = vunpack.c.l.b16 %v602
      %v662 = vunpack.c.h.b16 %v602
      %v663 = vunpack.c.l.b16 %v603
      %v664 = vunpack.c.l.b16 %v604
      %v665 = vunpack.c.h.b16 %v604
      %v666 = vunpack.c.l.b16 %v605
      %v667 = vunpack.c.l.b16 %v606
      %v668 = vunpack.c.h.b16 %v606
      %v669 = vunpack.c.l.b16 %v607
      %v670 = vunpack.c.l.b16 %v608
      %v671 = vunpack.c.h.b16 %v608
      %v672 = vunpack.c.l.b16 %v609
      %v673 = vunpack.c.l.b16 %v610
      %v674 = vunpack.c.h.b16 %v610
      %v675 = vunpack.c.l.b16 %v611
      %v676 = vunpack.c.l.b16 %v612
      %v677 = vunpack.c.h.b16 %v612
      %v678 = vunpack.c.l.b16 %v613
      %v679 = vunpack.c.l.b16 %v614
      %v680 = vunpack.c.h.b16 %v614
      %v681 = vunpack.c.l.b16 %v615
      %v682 = vunpack.c.l.b16 %v616
      %v683 = vunpack.c.h.b16 %v616
      %v684 = vunpack.c.l.b16 %v617
      %v685 = vpack.c.b16 %v664, %v661
      %v686 = vpack.c.b16 %v665, %v662
      %v687 = vpack.c.b16 %v666, %v663
      %v688 = vpack.c.b16 %v670, %v667
      %v689 = vpack.c.b16 %v671, %v668
      %v690 = vpack.c.b16 %v672, %v669
      %v691 = vpack.c.b16 %v676, %v673
      %v692 = vpack.c.b16 %v677, %v674
      %v693 = vpack.c.b16 %v678, %v675
      %v694 = vpack.c.b16 %v682, %v679
      %v695 = vpack.c.b16 %v683, %v680
      %v696 = vpack.c.b16 %v684, %v681
      %vm709 = vcmask 523264
      %v711 = vsel %vm709, %v643, 0
      %v714 = vsel %vm709, %v644, 0
      %716 = vmatprep.subr.bf16.mxu0 %v686
      %717 = vmatpush1.bf16.msra.mxu0 %v685
      %718 = vmatprep.subr.bf16.mxu0 %v689
      %719 = vmatpush1.bf16.msra.mxu0 %v688
      %720 = vmatprep.subr.bf16.mxu0 %v692
      %721 = vmatpush1.bf16.msra.mxu0 %v691
      %722 = vmatprep.subr.bf16.mxu0 %v695
      %723 = vmatpush1.bf16.msra.mxu0 %v694
      %724 = vmatprep.subr.bf16.mxu0 0
      %725 = vmatpush1.bf16.msra.mxu0 0
      %726 = vmatprep.subr.bf16.mxu0 0
      %727 = vmatpush1.bf16.msra.mxu0 0
      %728 = vmatprep.subr.bf16.mxu0 0
      %729 = vmatpush1.bf16.msra.mxu0 0
      %730 = vmatprep.subr.bf16.mxu0 0
      %731 = vmatpush1.bf16.msra.mxu0 0
      %732 = vmatprep.subr.bf16.mxu0 0
      %733 = vmatpush1.bf16.msra.mxu0 0
      %734 = vmatprep.subr.bf16.mxu0 0
      %735 = vmatpush1.bf16.msra.mxu0 0
      %736 = vmatprep.subr.bf16.mxu0 0
      %737 = vmatpush1.bf16.msra.mxu0 0
      %738 = vmatprep.subr.bf16.mxu0 0
      %739 = vmatpush1.bf16.msra.mxu0 0
      %740 = vmatprep.subr.bf16.mxu0 0
      %741 = vmatpush1.bf16.msra.mxu0 0
      %742 = vmatprep.subr.bf16.mxu0 0
      %743 = vmatpush1.bf16.msra.mxu0 0
      %744 = vmatprep.subr.bf16.mxu0 0
      %745 = vmatpush1.bf16.msra.mxu0 0
      %746 = vmatprep.subr.bf16.mxu0 0
      %747 = vmatpush1.bf16.msra.mxu0 0
      %748 = vmatprep.mubr.bf16.mxu0 0
      %749 = vmatmul.mubr.bf16.gmra.mrb[0].mxu0 %v711
      %v750 = vpop.f32.mrb[0].mxu0
      %v751 = vadd.f32 %v623, %v750
      %v752 = vpop.f32.mrb[0].mxu0
      %v753 = vadd.f32 %v627, %v752
      %v754 = vpop.f32.mrb[0].mxu0
      %v755 = vadd.f32 %v623, %v754
      %v756 = vpop.f32.mrb[0].mxu0
      %v757 = vadd.f32 %v627, %v756
      %758 = vmatprep.mubr.bf16.mxu0 0
      %759 = vmatmul.mubr.bf16.gmra.mrb[0].mxu0 %v714
      %v760 = vpop.f32.mrb[0].mxu0
      %v761 = vadd.f32 %v623, %v760
      %v762 = vpop.f32.mrb[0].mxu0
      %v763 = vadd.f32 %v627, %v762
      %v764 = vpop.f32.mrb[0].mxu0
      %v765 = vadd.f32 %v623, %v764
      %v766 = vpop.f32.mrb[0].mxu0
      %v767 = vadd.f32 %v627, %v766
      %768 = vdwg.mxu0
      %769 = vmatprep.subr.bf16.mxu0 0
      %770 = vmatpush1.bf16.msra.mxu0 %v687
      %771 = vmatprep.subr.bf16.mxu0 0
      %772 = vmatpush1.bf16.msra.mxu0 %v690
      %773 = vmatprep.subr.bf16.mxu0 0
      %774 = vmatpush1.bf16.msra.mxu0 %v693
      %775 = vmatprep.subr.bf16.mxu0 0
      %776 = vmatpush1.bf16.msra.mxu0 %v696
      %777 = vmatprep.subr.bf16.mxu0 0
      %778 = vmatpush1.bf16.msra.mxu0 0
      %779 = vmatprep.subr.bf16.mxu0 0
      %780 = vmatpush1.bf16.msra.mxu0 0
      %781 = vmatprep.subr.bf16.mxu0 0
      %782 = vmatpush1.bf16.msra.mxu0 0
      %783 = vmatprep.subr.bf16.mxu0 0
      %784 = vmatpush1.bf16.msra.mxu0 0
      %785 = vmatprep.subr.bf16.mxu0 0
      %786 = vmatpush1.bf16.msra.mxu0 0
      %787 = vmatprep.subr.bf16.mxu0 0
      %788 = vmatpush1.bf16.msra.mxu0 0
      %789 = vmatprep.subr.bf16.mxu0 0
      %790 = vmatpush1.bf16.msra.mxu0 0
      %791 = vmatprep.subr.bf16.mxu0 0
      %792 = vmatpush1.bf16.msra.mxu0 0
      %793 = vmatprep.subr.bf16.mxu0 0
      %794 = vmatpush1.bf16.msra.mxu0 0
      %795 = vmatprep.subr.bf16.mxu0 0
      %796 = vmatpush1.bf16.msra.mxu0 0
      %797 = vmatprep.subr.bf16.mxu0 0
      %798 = vmatpush1.bf16.msra.mxu0 0
      %799 = vmatprep.subr.bf16.mxu0 0
      %800 = vmatpush1.bf16.msra.mxu0 0
      %801 = vmatprep.mubr.bf16.mxu0 0
      %802 = vmatmul.mubr.bf16.gmra.mrb[0].mxu0 %v711
      %v803 = vpop.f32.mrb[0].mxu0
      %v804 = vadd.f32 %v631, %v803
      %v805 = vpop.f32.mrb[0].mxu0
      %v806 = vpop.f32.mrb[0].mxu0
      %v807 = vadd.f32 %v631, %v806
      %v808 = vpop.f32.mrb[0].mxu0
      %809 = vmatprep.mubr.bf16.mxu0 0
      %810 = vmatmul.mubr.bf16.gmra.mrb[0].mxu0 %v714
      %v811 = vpop.f32.mrb[0].mxu0
      %v812 = vadd.f32 %v631, %v811
      %v813 = vpop.f32.mrb[0].mxu0
      %v814 = vpop.f32.mrb[0].mxu0
      %v815 = vadd.f32 %v631, %v814
      %v816 = vpop.f32.mrb[0].mxu0
      %817 = vdwg.mxu0
      %v818 = vmax.f32 %v804, 0.0
      %v819 = vmax.f32 %v807, 0.0
      %v820 = vmax.f32 %v812, 0.0
      %v821 = vmax.f32 %v815, 0.0
      %v822 = vpack.c.bf16 %v819, %v818
      %v823 = vpack.c.bf16 %v821, %v820
      %v824 = vld [vmem:[%s4] sm:$0xff]
      %v825 = vld [vmem:[%s4 + $0x8] sm:$0xff]
      %v826 = vld [vmem:[%s4 + $0x10] sm:$0xff]
      %v827 = vld [vmem:[%s4 + $0x18] sm:$0xff]
      %v828 = vld [vmem:[%s4 + $0x20] sm:$0xff]
      %v829 = vld [vmem:[%s4 + $0x28] sm:$0xff]
      %v830 = vld [vmem:[%s4 + $0x30] sm:$0xff]
      %v831 = vld [vmem:[%s4 + $0x38] sm:$0xff]
      %v832 = vld [vmem:[%s5] sm:$0x3]
      %v834 = vlaneseq
      %v835 = vshrl.u32 %v834, 7
      %v836 = vsub.s32 0, %v835
      %v837 = vrot.slane %v832, %v836
      %v838 = vlaneseq
      %v839 = vshrl.u32 %v838, 7
      %v840 = vsub.s32 1, %v839
      %v841 = vrot.slane %v832, %v840
      %v852 = vunpack.c.l.b16 %v824
      %v853 = vunpack.c.h.b16 %v824
      %v854 = vunpack.c.l.b16 %v825
      %v855 = vunpack.c.h.b16 %v825
      %v856 = vunpack.c.l.b16 %v826
      %v857 = vunpack.c.h.b16 %v826
      %v858 = vunpack.c.l.b16 %v827
      %v859 = vunpack.c.h.b16 %v827
      %v860 = vunpack.c.l.b16 %v828
      %v861 = vunpack.c.h.b16 %v828
      %v862 = vunpack.c.l.b16 %v829
      %v863 = vunpack.c.h.b16 %v829
      %v864 = vunpack.c.l.b16 %v830
      %v865 = vunpack.c.h.b16 %v830
      %v866 = vunpack.c.l.b16 %v831
      %v867 = vunpack.c.h.b16 %v831
      %v868 = vpack.c.b16 %v854, %v852
      %v869 = vpack.c.b16 %v855, %v853
      %v870 = vpack.c.b16 %v858, %v856
      %v871 = vpack.c.b16 %v859, %v857
      %v872 = vpack.c.b16 %v862, %v860
      %v873 = vpack.c.b16 %v863, %v861
      %v874 = vpack.c.b16 %v866, %v864
      %v875 = vpack.c.b16 %v867, %v865
      %v885 = vsel %vm709, %v822, 0
      %v888 = vsel %vm709, %v823, 0
      %890 = vmatprep.subr.bf16.mxu0 %v869
      %891 = vmatpush1.bf16.msra.mxu0 %v868
      %892 = vmatprep.subr.bf16.mxu0 %v871
      %893 = vmatpush1.bf16.msra.mxu0 %v870
      %894 = vmatprep.subr.bf16.mxu0 %v873
      %895 = vmatpush1.bf16.msra.mxu0 %v872
      %896 = vmatprep.subr.bf16.mxu0 %v875
      %897 = vmatpush1.bf16.msra.mxu0 %v874
      %898 = vmatprep.subr.bf16.mxu0 0
      %899 = vmatpush1.bf16.msra.mxu0 0
      %900 = vmatprep.subr.bf16.mxu0 0
      %901 = vmatpush1.bf16.msra.mxu0 0
      %902 = vmatprep.subr.bf16.mxu0 0
      %903 = vmatpush1.bf16.msra.mxu0 0
      %904 = vmatprep.subr.bf16.mxu0 0
      %905 = vmatpush1.bf16.msra.mxu0 0
      %906 = vmatprep.subr.bf16.mxu0 0
      %907 = vmatpush1.bf16.msra.mxu0 0
      %908 = vmatprep.subr.bf16.mxu0 0
      %909 = vmatpush1.bf16.msra.mxu0 0
      %910 = vmatprep.subr.bf16.mxu0 0
      %911 = vmatpush1.bf16.msra.mxu0 0
      %912 = vmatprep.subr.bf16.mxu0 0
      %913 = vmatpush1.bf16.msra.mxu0 0
      %914 = vmatprep.subr.bf16.mxu0 0
      %915 = vmatpush1.bf16.msra.mxu0 0
      %916 = vmatprep.subr.bf16.mxu0 0
      %917 = vmatpush1.bf16.msra.mxu0 0
      %918 = vmatprep.subr.bf16.mxu0 0
      %919 = vmatpush1.bf16.msra.mxu0 0
      %920 = vmatprep.subr.bf16.mxu0 0
      %921 = vmatpush1.bf16.msra.mxu0 0
      %922 = vmatprep.mubr.bf16.mxu0 0
      %923 = vmatmul.mubr.bf16.gmra.mrb[0].mxu0 %v885
      %v924 = vpop.f32.mrb[0].mxu0
      %v925 = vadd.f32 %v837, %v924
      %v926 = vpop.f32.mrb[0].mxu0
      %v927 = vadd.f32 %v841, %v926
      %v928 = vpop.f32.mrb[0].mxu0
      %v929 = vadd.f32 %v837, %v928
      %v930 = vpop.f32.mrb[0].mxu0
      %v931 = vadd.f32 %v841, %v930
      %932 = vmatprep.mubr.bf16.mxu0 0
      %933 = vmatmul.mubr.bf16.gmra.mrb[0].mxu0 %v888
      %v934 = vpop.f32.mrb[0].mxu0
      %v935 = vadd.f32 %v837, %v934
      %v936 = vpop.f32.mrb[0].mxu0
      %v937 = vadd.f32 %v841, %v936
      %v938 = vpop.f32.mrb[0].mxu0
      %v939 = vadd.f32 %v837, %v938
      %v940 = vpop.f32.mrb[0].mxu0
      %v941 = vadd.f32 %v841, %v940
      %942 = vdwg.mxu0
      %v943 = vadd.f32 %v925, %v751
      %v944 = vadd.f32 %v927, %v753
      %v945 = vadd.f32 %v929, %v755
      %v946 = vadd.f32 %v931, %v757
      %v947 = vadd.f32 %v935, %v761
      %v948 = vadd.f32 %v937, %v763
      %v949 = vadd.f32 %v939, %v765
      %v950 = vadd.f32 %v941, %v767
      %v951 = vmax.f32 %v943, 0.0
      %v952 = vmax.f32 %v944, 0.0
      %v953 = vmax.f32 %v945, 0.0
      %v954 = vmax.f32 %v946, 0.0
      %v955 = vmax.f32 %v947, 0.0
      %v956 = vmax.f32 %v948, 0.0
      %v957 = vmax.f32 %v949, 0.0
      %v958 = vmax.f32 %v950, 0.0
      %v959 = vld [vmem:[%s1] sm:$0xff]
      %v960 = vld [vmem:[%s1 + $0x8] sm:$0xff]
      %v961 = vld [vmem:[%s1 + $0x10] sm:$0xff]
      %v962 = vld [vmem:[%s1 + $0x18] sm:$0x1]
      %964 = vset.pattern.permute.xlu0 0
      %965 = vperm.xlu0 %964, %v959
      %v966 = vpop.permute.xlu0 %965
      %969 = vset.pattern.permute.xlu0 0
      %970 = vperm.xlu0 %969, %v960
      %v971 = vpop.permute.xlu0 %970
      %974 = vset.pattern.permute.xlu0 0
      %975 = vperm.xlu0 %974, %v961
      %v976 = vpop.permute.xlu0 %975
      %979 = vset.pattern.permute.xlu0 0
      %980 = vperm.xlu0 %979, %v962
      %v981 = vpop.permute.xlu0 %980
      %v983 = vmul.f32 %v951, %v966
      %v984 = vmul.f32 %v952, %v966
      %v985 = vmul.f32 %v953, %v971
      %v986 = vmul.f32 %v954, %v971
      %v987 = vmul.f32 %v955, %v976
      %v988 = vmul.f32 %v956, %v976
      %v989 = vmul.f32 %v957, %v981
      %v990 = vmul.f32 %v958, %v981
      %v991 = vadd.f32 %v983, %v985
      %v992 = vadd.f32 %v991, %v987
      %vm993 = vcmask 1040384
      %v994 = vsel %vm993, %v989, 0.0
      %v995 = vadd.f32 %v992, %v994
      %v996 = vrot.slane %v995, 4
      %v997 = vadd.f32 %v995, %v996
      %v998 = vrot.slane %v997, 2
      %v999 = vadd.f32 %v997, %v998
      %v1000 = vrot.slane %v999, 1
      %v1001 = vadd.f32 %v999, %v1000
      %v1002 = vadd.f32 %v984, %v986
      %v1003 = vadd.f32 %v1002, %v988
      %v1004 = vsel %vm993, %v990, 0.0
      %v1005 = vadd.f32 %v1003, %v1004
      %v1006 = vrot.slane %v1005, 4
      %v1007 = vadd.f32 %v1005, %v1006
      %v1008 = vrot.slane %v1007, 2
      %v1009 = vadd.f32 %v1007, %v1008
      %v1010 = vrot.slane %v1009, 1
      %v1011 = vadd.f32 %v1009, %v1010
      %v1012 = vld [vmem:[%s6] sm:$0xff]
      %v1013 = vld [vmem:[%s6 + $0x8] sm:$0xff]
      %v1014 = vld [vmem:[%s6 + $0x10] sm:$0xff]
      %v1015 = vld [vmem:[%s6 + $0x18] sm:$0xff]
      %v1016 = vld [vmem:[%s6 + $0x20] sm:$0xff]
      %v1017 = vld [vmem:[%s6 + $0x28] sm:$0xff]
      %v1018 = vld [vmem:[%s6 + $0x30] sm:$0xff]
      %v1019 = vld [vmem:[%s6 + $0x38] sm:$0xff]
      %v1020 = vld [vmem:[%s6 + $0x40] sm:$0xff]
      %v1021 = vld [vmem:[%s6 + $0x48] sm:$0xff]
      %v1022 = vld [vmem:[%s6 + $0x50] sm:$0xff]
      %v1023 = vld [vmem:[%s6 + $0x58] sm:$0xff]
      %v1024 = vld [vmem:[%s6 + $0x60] sm:$0xff]
      %v1025 = vld [vmem:[%s6 + $0x68] sm:$0xff]
      %v1026 = vld [vmem:[%s6 + $0x70] sm:$0xff]
      %v1027 = vld [vmem:[%s6 + $0x78] sm:$0xff]
      %v1028 = vld [vmem:[%s6 + $0x80] sm:$0xff]
      %v1029 = vld [vmem:[%s6 + $0x88] sm:$0xff]
      %v1030 = vld [vmem:[%s6 + $0x90] sm:$0xff]
      %v1031 = vld [vmem:[%s6 + $0x98] sm:$0xff]
      %v1032 = vld [vmem:[%s6 + $0xa0] sm:$0xff]
      %v1033 = vld [vmem:[%s6 + $0xa8] sm:$0xff]
      %v1034 = vld [vmem:[%s6 + $0xb0] sm:$0xff]
      %v1035 = vld [vmem:[%s6 + $0xb8] sm:$0xff]
      %v1036 = vld [vmem:[%s6 + $0xc0] sm:$0xff]
      %v1037 = vld [vmem:[%s6 + $0xc8] sm:$0xff]
      %v1038 = vld [vmem:[%s6 + $0xd0] sm:$0xff]
      %v1039 = vld [vmem:[%s6 + $0xd8] sm:$0xff]
      %v1040 = vld [vmem:[%s6 + $0xe0] sm:$0xff]
      %v1041 = vld [vmem:[%s6 + $0xe8] sm:$0xff]
      %v1042 = vld [vmem:[%s6 + $0xf0] sm:$0xff]
      %v1043 = vld [vmem:[%s6 + $0xf8] sm:$0xff]
      %v1044 = vld [vmem:[%s7] sm:$0x1]
      %1045 = vmatprep.subr.mxu0 0.0
      %1046 = vmatpush1.msra.mxu0 %v1012
      %1047 = vmatprep.subr.mxu0 0.0
      %1048 = vmatpush1.msra.mxu0 %v1013
      %1049 = vmatprep.subr.mxu0 0.0
      %1050 = vmatpush1.msra.mxu0 %v1014
      %1051 = vmatprep.subr.mxu0 0.0
      %1052 = vmatpush1.msra.mxu0 %v1015
      %1053 = vmatprep.subr.mxu0 0.0
      %1054 = vmatpush1.msra.mxu0 %v1016
      %1055 = vmatprep.subr.mxu0 0.0
      %1056 = vmatpush1.msra.mxu0 %v1017
      %1057 = vmatprep.subr.mxu0 0.0
      %1058 = vmatpush1.msra.mxu0 %v1018
      %1059 = vmatprep.subr.mxu0 0.0
      %1060 = vmatpush1.msra.mxu0 %v1019
      %1061 = vmatprep.subr.mxu0 0.0
      %1062 = vmatpush1.msra.mxu0 %v1020
      %1063 = vmatprep.subr.mxu0 0.0
      %1064 = vmatpush1.msra.mxu0 %v1021
      %1065 = vmatprep.subr.mxu0 0.0
      %1066 = vmatpush1.msra.mxu0 %v1022
      %1067 = vmatprep.subr.mxu0 0.0
      %1068 = vmatpush1.msra.mxu0 %v1023
      %1069 = vmatprep.subr.mxu0 0.0
      %1070 = vmatpush1.msra.mxu0 %v1024
      %1071 = vmatprep.subr.mxu0 0.0
      %1072 = vmatpush1.msra.mxu0 %v1025
      %1073 = vmatprep.subr.mxu0 0.0
      %1074 = vmatpush1.msra.mxu0 %v1026
      %1075 = vmatprep.subr.mxu0 0.0
      %1076 = vmatpush1.msra.mxu0 %v1027
      %1077 = vmatprep.subr.mxu0 0.0
      %1078 = vmatpush1.msra.mxu0 %v1028
      %1079 = vmatprep.subr.mxu0 0.0
      %1080 = vmatpush1.msra.mxu0 %v1029
      %1081 = vmatprep.subr.mxu0 0.0
      %1082 = vmatpush1.msra.mxu0 %v1030
      %1083 = vmatprep.subr.mxu0 0.0
      %1084 = vmatpush1.msra.mxu0 %v1031
      %1085 = vmatprep.subr.mxu0 0.0
      %1086 = vmatpush1.msra.mxu0 %v1032
      %1087 = vmatprep.subr.mxu0 0.0
      %1088 = vmatpush1.msra.mxu0 %v1033
      %1089 = vmatprep.subr.mxu0 0.0
      %1090 = vmatpush1.msra.mxu0 %v1034
      %1091 = vmatprep.subr.mxu0 0.0
      %1092 = vmatpush1.msra.mxu0 %v1035
      %1093 = vmatprep.subr.mxu0 0.0
      %1094 = vmatpush1.msra.mxu0 %v1036
      %1095 = vmatprep.subr.mxu0 0.0
      %1096 = vmatpush1.msra.mxu0 %v1037
      %1097 = vmatprep.subr.mxu0 0.0
      %1098 = vmatpush1.msra.mxu0 %v1038
      %1099 = vmatprep.subr.mxu0 0.0
      %1100 = vmatpush1.msra.mxu0 %v1039
      %1101 = vmatprep.subr.mxu0 0.0
      %1102 = vmatpush1.msra.mxu0 %v1040
      %1103 = vmatprep.subr.mxu0 0.0
      %1104 = vmatpush1.msra.mxu0 %v1041
      %1105 = vmatprep.subr.mxu0 0.0
      %1106 = vmatpush1.msra.mxu0 %v1042
      %1107 = vmatprep.subr.mxu0 0.0
      %1108 = vmatpush1.msra.mxu0 %v1043
      %1109 = vmatprep.mubr.f32.mxu0 %v1011
      %1110 = vmatmul.mubr.f32.gmra.mrb[0].mxu0 %v1001
      %v1111 = vpop.f32.mrb[0].mxu0
      %v1112 = vadd.f32 %v1044, %v1111
      %v1113 = vpop.f32.mrb[0].mxu0
      %1114 = vdwg.mxu0
      %v1115 = vmax.f32 %v1112, 0.0
      %v1116 = vld [vmem:[%s8] sm:$0xff]
      %v1117 = vld [vmem:[%s8 + $0x8] sm:$0xff]
      %v1118 = vld [vmem:[%s8 + $0x10] sm:$0xff]
      %v1119 = vld [vmem:[%s8 + $0x18] sm:$0xff]
      %v1120 = vld [vmem:[%s8 + $0x20] sm:$0xff]
      %v1121 = vld [vmem:[%s8 + $0x28] sm:$0xff]
      %v1122 = vld [vmem:[%s8 + $0x30] sm:$0xff]
      %v1123 = vld [vmem:[%s8 + $0x38] sm:$0xff]
      %v1124 = vld [vmem:[%s8 + $0x40] sm:$0xff]
      %v1125 = vld [vmem:[%s8 + $0x48] sm:$0xff]
      %v1126 = vld [vmem:[%s8 + $0x50] sm:$0xff]
      %v1127 = vld [vmem:[%s8 + $0x58] sm:$0xff]
      %v1128 = vld [vmem:[%s9] sm:$0x1]
      %vm1129 = vcmask 785408
      %v1131 = vsel %vm1129, %v1115, 0
      %1133 = vmatprep.subr.mxu0 0.0
      %1134 = vmatpush1.msra.mxu0 %v1116
      %1135 = vmatprep.subr.mxu0 0.0
      %1136 = vmatpush1.msra.mxu0 %v1117
      %1137 = vmatprep.subr.mxu0 0.0
      %1138 = vmatpush1.msra.mxu0 %v1118
      %1139 = vmatprep.subr.mxu0 0.0
      %1140 = vmatpush1.msra.mxu0 %v1119
      %1141 = vmatprep.subr.mxu0 0.0
      %1142 = vmatpush1.msra.mxu0 %v1120
      %1143 = vmatprep.subr.mxu0 0.0
      %1144 = vmatpush1.msra.mxu0 %v1121
      %1145 = vmatprep.subr.mxu0 0.0
      %1146 = vmatpush1.msra.mxu0 %v1122
      %1147 = vmatprep.subr.mxu0 0.0
      %1148 = vmatpush1.msra.mxu0 %v1123
      %1149 = vmatprep.subr.mxu0 0.0
      %1150 = vmatpush1.msra.mxu0 %v1124
      %1151 = vmatprep.subr.mxu0 0.0
      %1152 = vmatpush1.msra.mxu0 %v1125
      %1153 = vmatprep.subr.mxu0 0.0
      %1154 = vmatpush1.msra.mxu0 %v1126
      %1155 = vmatprep.subr.mxu0 0.0
      %1156 = vmatpush1.msra.mxu0 %v1127
      %1157 = vmatprep.subr.mxu0 0.0
      %1158 = vmatpush1.msra.mxu0 0.0
      %1159 = vmatprep.subr.mxu0 0.0
      %1160 = vmatpush1.msra.mxu0 0.0
      %1161 = vmatprep.subr.mxu0 0.0
      %1162 = vmatpush1.msra.mxu0 0.0
      %1163 = vmatprep.subr.mxu0 0.0
      %1164 = vmatpush1.msra.mxu0 0.0
      %1165 = vmatprep.subr.mxu0 0.0
      %1166 = vmatpush1.msra.mxu0 0.0
      %1167 = vmatprep.subr.mxu0 0.0
      %1168 = vmatpush1.msra.mxu0 0.0
      %1169 = vmatprep.subr.mxu0 0.0
      %1170 = vmatpush1.msra.mxu0 0.0
      %1171 = vmatprep.subr.mxu0 0.0
      %1172 = vmatpush1.msra.mxu0 0.0
      %1173 = vmatprep.subr.mxu0 0.0
      %1174 = vmatpush1.msra.mxu0 0.0
      %1175 = vmatprep.subr.mxu0 0.0
      %1176 = vmatpush1.msra.mxu0 0.0
      %1177 = vmatprep.subr.mxu0 0.0
      %1178 = vmatpush1.msra.mxu0 0.0
      %1179 = vmatprep.subr.mxu0 0.0
      %1180 = vmatpush1.msra.mxu0 0.0
      %1181 = vmatprep.subr.mxu0 0.0
      %1182 = vmatpush1.msra.mxu0 0.0
      %1183 = vmatprep.subr.mxu0 0.0
      %1184 = vmatpush1.msra.mxu0 0.0
      %1185 = vmatprep.subr.mxu0 0.0
      %1186 = vmatpush1.msra.mxu0 0.0
      %1187 = vmatprep.subr.mxu0 0.0
      %1188 = vmatpush1.msra.mxu0 0.0
      %1189 = vmatprep.subr.mxu0 0.0
      %1190 = vmatpush1.msra.mxu0 0.0
      %1191 = vmatprep.subr.mxu0 0.0
      %1192 = vmatpush1.msra.mxu0 0.0
      %1193 = vmatprep.subr.mxu0 0.0
      %1194 = vmatpush1.msra.mxu0 0.0
      %1195 = vmatprep.subr.mxu0 0.0
      %1196 = vmatpush1.msra.mxu0 0.0
      %1197 = vmatprep.mubr.f32.mxu0 0.0
      %1198 = vmatmul.mubr.f32.gmra.mrb[0].mxu0 %v1131
      %v1199 = vpop.f32.mrb[0].mxu0
      %v1200 = vadd.f32 %v1128, %v1199
      %v1201 = vpop.f32.mrb[0].mxu0
      %1202 = vdwg.mxu0
      %1203 = vst [vmem:[%s355] sm:$0x1] %v1200
      %p1204 = scmp.lt.s32.totalorder %s21, 1
      %s1205 = scalar_select %p1204, %s21, 1
      %s1206 = scalar_lea.vmem %s10, %s1205
      // Predicated region
      $region61: #{wangnet_forward.3} parent=59 // pred_check
        %p1207 = pneg %p254
      $region62: #{wangnet_forward.3} parent=59 // pred_check_branch
        %1209 = sbr.rel (%p1207) target = $region64
      $region63: #{wangnet_forward.3} parent=59 // pred_region
        _
      $region64: #{wangnet_forward.3} parent=59 // pred_fallthru
        _
    $region60: #{wangnet_forward.3} parent=5 // pred_fallthru
      _
    %p1210 = scmp.le.s32.totalorder 2, %s16
    // Predicated region
    $region65: #{wangnet_forward.3} parent=5 // pred_check
      %p1211 = pneg %p1210
    $region66: #{wangnet_forward.3} parent=5 // pred_check_branch
      %1213 = sbr.rel (%p1211) target = $region68
    $region67: #{wangnet_forward.3} parent=5 // pred_region
      %s1214 = ssub.s32 %s16, 2
      // Predicated region
      $region69: #{wangnet_forward.3} parent=67 // pred_check
        %p1215 = pneg %p260
      $region70: #{wangnet_forward.3} parent=67 // pred_check_branch
        %1217 = sbr.rel (%p1215) target = $region72
      $region71: #{wangnet_forward.3} parent=67 // pred_region
        %p1218 = scmp.lt.s32.totalorder %s22, 1
        %s1219 = scalar_select %p1218, %s22, 1
        %s1220 = scalar_lea.vmem %s10, %s1219
      $region72: #{wangnet_forward.3} parent=67 // pred_fallthru
        _
    $region68: #{wangnet_forward.3} parent=5 // pred_fallthru
      _
  $region6: #{wangnet_forward.3} parent=0 // loop_footer
    %s20 = sadd.s32 1, %s16
  $region7: #{wangnet_forward.3} parent=0 // loop_footer_branch
    %15 = sbr.rel target = $region3
  $region8: #{wangnet_forward.3} parent=0 // loop_exit
    _

</llo_original>
